<compile_context>
chip_gen: v6e
topology: v6e:2x2x1
jax: 0.10.0
libtpu: 0.0.40
codegen_flags: <defaults>
</compile_context>

<pallas_src>
import jax
import jax.numpy as jnp
from jax.experimental import pallas as pl
from jax.experimental.pallas import tpu as pltpu


# ---------------------------------------------------------------------------
# In-kernel helpers
# ---------------------------------------------------------------------------
def _sum_over(t, axes):
    """Chain of single-axis keepdims reductions (robust Mosaic lowering)."""
    for a in sorted(axes, reverse=True):
        t = jnp.sum(t, axis=a, keepdims=True)
    return t


def _norm_one_pass(t, axes):
    """(t - mean) / (unbiased_std + 1e-3) with fused one-pass statistics.

    s1 and s2 are both computed directly from t (no reduce->subtract->reduce
    dependency chain); the scale is a broadcast multiply by a reciprocal.
    """
    n = 1
    for a in axes:
        n *= t.shape[a]
    s1 = _sum_over(t, axes)
    s2 = _sum_over(t * t, axes)
    mean = s1 * (1.0 / float(n))
    var = jnp.maximum(s2 - s1 * mean, 0.0) * (1.0 / float(max(n - 1, 1)))
    inv = 1.0 / (jnp.sqrt(var) + 0.001)
    return (t - mean) * inv


# ---------------------------------------------------------------------------
# Kernel: one grid step == Bt samples (a (Bt, N, E) block of meme populations)
# ---------------------------------------------------------------------------
def classifier_kernel(
    x_ref,                                  # (Bt, N, E)  per-block memes
    w1_ref, w2_ref, w3_ref,                 # MemeWeighter weights
    wc1_ref, wc2_ref, wc3_ref,              # MemeClassifier weights (wc3 padded)
    bpack_ref,                              # (8, BW) packed bias rows
    out_ref,                                # (Bt, C_pad) lane-dense output
):
    Bt, N, E = x_ref.shape
    x3 = x_ref[...]                         # (Bt, N, E) float32
    x2 = x3.reshape(Bt * N, E)              # rows = all nodes of all samples

    d1 = w1_ref.shape[1]
    d2 = w2_ref.shape[1]
    d4 = wc1_ref.shape[1]
    d5 = wc2_ref.shape[1]
    d6 = wc3_ref.shape[1]

    # Static slices into the single packed bias array (one DMA for all biases).
    b1 = bpack_ref[0:1, 0:d1]
    b2 = bpack_ref[1:2, 0:d2]
    b3 = bpack_ref[2:3, 0:1]
    bc1 = bpack_ref[3:4, 0:d4]
    bc2 = bpack_ref[4:5, 0:d5]
    bc3 = bpack_ref[5:6, 0:d6]

    def dense_block_nodes(t2, w_ref, b):
        """Linear -> per-sample InstanceNorm -> ReLU, on (Bt*N, din) rows."""
        h = jnp.dot(t2, w_ref[...], preferred_element_type=jnp.float32) + b
        dout = h.shape[1]
        h3 = _norm_one_pass(h.reshape(Bt, N, dout), axes=(1, 2))
        return jnp.maximum(h3, 0.0).reshape(Bt * N, dout)

    def dense_block_rows(t, w_ref, b):
        """Linear -> per-row (per-sample) InstanceNorm -> ReLU, on (Bt, din)."""
        h = jnp.dot(t, w_ref[...], preferred_element_type=jnp.float32) + b
        return jnp.maximum(_norm_one_pass(h, axes=(1,)), 0.0)

    # ---- MemeWeighter: DenseBlock(E,E/2) -> DenseBlock(E/2,E/4)
    #                    -> Linear(E/4,1) -> InstanceNorm (per sample)
    h = dense_block_nodes(x2, w1_ref, b1)                                   # (Bt*N, E/2)
    h = dense_block_nodes(h, w2_ref, b2)                                    # (Bt*N, E/4)
    wts = jnp.dot(h, w3_ref[...], preferred_element_type=jnp.float32) + b3  # (Bt*N, 1)
    wts3 = _norm_one_pass(wts.reshape(Bt, N, 1), axes=(1, 2))               # (Bt, N, 1)

    # ---- einsum('ne,n->e') for all Bt samples at once: broadcast multiply
    #      + one sublane reduction over the node axis (tiny; avoids Bt
    #      serialized M=1 MXU passes and any lane<->sublane relayout).
    v = jnp.sum(wts3 * x3, axis=1)                                          # (Bt, E)

    # ---- global normalization (x - mean) / (std + 1e-3), per sample
    v = _norm_one_pass(v, axes=(1,))                                        # (Bt, E)

    # ---- MemeClassifier with M = Bt rows:
    #      DenseBlock(E,2E) -> DenseBlock(2E,4E) -> Linear (padded to C_pad)
    c = dense_block_rows(v, wc1_ref, bc1)                                   # (Bt, 2E)
    c = dense_block_rows(c, wc2_ref, bc2)                                   # (Bt, 4E)
    out_ref[...] = (
        jnp.dot(c, wc3_ref[...], preferred_element_type=jnp.float32) + bc3
    )                                                                       # (Bt, C_pad)


# ---------------------------------------------------------------------------
# Host-side parameter construction / packing
# ---------------------------------------------------------------------------
def _round_up(n, m):
    return (n + m - 1) // m * m


def init_params(key, meme_dim, num_classes):
    """Deterministic synthetic parameters (Linear weights stored (in, out))."""
    a = meme_dim
    dims = [(a, a // 2), (a // 2, a // 4), (a // 4, 1),        # MemeWeighter
            (a, a * 2), (a * 2, a * 4), (a * 4, num_classes)]  # MemeClassifier
    wnames = ["w1", "w2", "w3", "wc1", "wc2", "wc3"]
    bnames = ["b1", "b2", "b3", "bc1", "bc2", "bc3"]
    params = {}
    keys = jax.random.split(key, len(dims) * 2)
    for i, ((din, dout), wn, bn) in enumerate(zip(dims, wnames, bnames)):
        scale = 1.0 / jnp.sqrt(float(din))
        params[wn] = (scale * jax.random.normal(keys[2 * i], (din, dout))
                      ).astype(jnp.float32)
        params[bn] = (scale * jax.random.normal(keys[2 * i + 1], (dout,))
                      ).astype(jnp.float32)
    return params


def pack_params(params, num_classes):
    """Pad final layer to a lane-dense width; pack the 6 bias rows into one array."""
    # TODO(synk): on v6e/v7x large-E configs, cast w*/wc* to bf16 here (keep
    #             f32 accumulation + f32 norms) to halve weight DMA/VMEM.
    wc3 = params["wc3"]                                    # (4E, C)
    c_pad = _round_up(max(num_classes, 1), 128)
    wc3_p = jnp.zeros((wc3.shape[0], c_pad), jnp.float32).at[:, :num_classes].set(wc3)
    bc3_p = jnp.zeros((c_pad,), jnp.float32).at[:num_classes].set(params["bc3"])

    biases = [params["b1"], params["b2"], params["b3"],
              params["bc1"], params["bc2"], bc3_p]
    bw = _round_up(max(b.shape[0] for b in biases), 128)
    bpack = jnp.zeros((8, bw), jnp.float32)                # 8 sublanes (6 used)
    for i, b in enumerate(biases):
        bpack = bpack.at[i, : b.shape[0]].set(b)

    return dict(
        w1=params["w1"], w2=params["w2"], w3=params["w3"],
        wc1=params["wc1"], wc2=params["wc2"], wc3=wc3_p,
        bpack=bpack, c_pad=c_pad, num_classes=num_classes,
    )


# ---------------------------------------------------------------------------
# Wrapper
# ---------------------------------------------------------------------------
def classifier_forward(x, packed, block_batch=8):
    """x: (B, N, E) or (N, E) float32 -> (B, num_classes) or (num_classes,)."""
    squeeze = x.ndim == 2
    if squeeze:
        x = x[None]
    B, N, E = x.shape
    c_pad = packed["c_pad"]
    num_classes = packed["num_classes"]

    # Bt samples per grid step; pad the batch to a multiple of Bt (padded
    # samples produce finite garbage that is sliced off below).
    Bt = int(max(1, min(block_batch, B)))
    B_pad = _round_up(B, Bt)
    if B_pad != B:
        x = jnp.concatenate([x, jnp.zeros((B_pad - B, N, E), x.dtype)], axis=0)

    w1, w2, w3 = packed["w1"], packed["w2"], packed["w3"]
    wc1, wc2, wc3 = packed["wc1"], packed["wc2"], packed["wc3"]
    bpack = packed["bpack"]

    def resident(arr):
        # Whole-array block whose index never changes across the batch grid:
        # the pipeline keeps it in VMEM instead of re-DMAing every step.
        # TODO(synk): pipeline_mode=pl.Buffered(1) would drop the redundant
        #             second buffer of each resident weight on the large-E
        #             path (matters on v7x's 64 MiB VMEM); negligible here.
        return pl.BlockSpec(arr.shape, lambda b: (0,) * arr.ndim)

    grid_spec = pltpu.PrefetchScalarGridSpec(
        num_scalar_prefetch=0,
        grid=(B_pad // Bt,),
        in_specs=[
            pl.BlockSpec((Bt, N, E), lambda b: (b, 0, 0)),   # Bt samples per step
            resident(w1), resident(w2), resident(w3),
            resident(wc1), resident(wc2), resident(wc3),
            resident(bpack),
        ],
        out_specs=pl.BlockSpec((Bt, c_pad), lambda b: (b, 0)),
    )

    out = pl.pallas_call(
        classifier_kernel,
        out_shape=jax.ShapeDtypeStruct((B_pad, c_pad), jnp.float32),
        grid_spec=grid_spec,
        compiler_params=pltpu.CompilerParams(
            dimension_semantics=("parallel",),   # batch axis: megacore-shardable
            vmem_limit_bytes=32 * 1024 * 1024,   # explicit; load-bearing on v5e
        ),
    )(x, w1, w2, w3, wc1, wc2, wc3, bpack)

    out = out[:B, :num_classes]
    if squeeze:
        out = out[0]
    return out


# ---------------------------------------------------------------------------
# Pure-JAX reference (for a sanity check)
# ---------------------------------------------------------------------------
def classifier_reference(x, params):
    hp = jax.lax.Precision.HIGHEST

    def norm(t):
        n = t.size
        c = t - jnp.mean(t)
        var = jnp.sum(c * c) / float(max(n - 1, 1))
        return c / (jnp.sqrt(var) + 0.001)

    def dense(t, w, b):
        return jnp.maximum(norm(jnp.dot(t, w, precision=hp) + b), 0.0)

    def single(xi):
        h = dense(xi, params["w1"], params["b1"])
        h = dense(h, params["w2"], params["b2"])
        w = norm(jnp.dot(h, params["w3"], precision=hp) + params["b3"])   # (N,1)
        v = jnp.dot(w[:, 0], xi, precision=hp)[None, :]                   # (1,E)
        v = norm(v)
        c = dense(v, params["wc1"], params["bc1"])
        c = dense(c, params["wc2"], params["bc2"])
        return (jnp.dot(c, params["wc3"], precision=hp) + params["bc3"])[0]

    return jax.vmap(single)(x)


# ---------------------------------------------------------------------------
if __name__ == "__main__":
    meme_dim = 32       # must be divisible by 4 (MemeWeighter uses E/2, E/4)
    num_classes = 8
    num_nodes = 16
    batch = 16          # 2 grid steps of 8 samples -> both TCs busy on v7x

    key = jax.random.PRNGKey(0)
    kx, kp = jax.random.split(key)
    x = jax.random.normal(kx, (batch, num_nodes, meme_dim), dtype=jnp.float32)
    params = init_params(kp, meme_dim, num_classes)
    packed = pack_params(params, num_classes)

    out = jax.block_until_ready(classifier_forward(x, packed, block_batch=8))
    assert out.shape == (batch, num_classes)
    assert bool(jnp.all(jnp.isfinite(out)))

    ref = jax.block_until_ready(classifier_reference(x, params))
    assert bool(jnp.allclose(out, ref, rtol=5e-2, atol=5e-2)), (
        "kernel/reference mismatch (batched)")

    # Single-sample (2-D input) path, matching the PyTorch forward signature.
    out1 = jax.block_until_ready(classifier_forward(x[0], packed))
    assert out1.shape == (num_classes,)
    assert bool(jnp.allclose(out1, ref[0], rtol=5e-2, atol=5e-2)), (
        "kernel/reference mismatch (single sample)")

    print("KERNEL_OK")
</pallas_src>

<mosaic_0001>
module attributes {stable_mosaic.version = 11 : i64} {
  func.func @classifier_kernel(%arg0: i32, %arg1: memref<8x16x32xf32, #tpu.memory_space<vmem>>, %arg2: memref<32x16xf32, #tpu.memory_space<vmem>>, %arg3: memref<16x8xf32, #tpu.memory_space<vmem>>, %arg4: memref<8x1xf32, #tpu.memory_space<vmem>>, %arg5: memref<32x64xf32, #tpu.memory_space<vmem>>, %arg6: memref<64x128xf32, #tpu.memory_space<vmem>>, %arg7: memref<128x128xf32, #tpu.memory_space<vmem>>, %arg8: memref<8x128xf32, #tpu.memory_space<vmem>>, %arg9: memref<8x128xf32, #tpu.memory_space<vmem>>) attributes {dimension_semantics = [#tpu.dimension_semantics<parallel>], iteration_bounds = array<i64: 2>, scalar_prefetch = 0 : i64, scratch_operands = 0 : i64, tpu.core_type = #tpu.core_type<tc>, window_params = [{transform_indices = @transform_0, window_bounds = array<i64: 8, 16, 32>}, {pipeline_mode = #tpu.pipeline_mode<synchronous>, transform_indices = @transform_1, window_bounds = array<i64: 32, 16>}, {pipeline_mode = #tpu.pipeline_mode<synchronous>, transform_indices = @transform_2, window_bounds = array<i64: 16, 8>}, {pipeline_mode = #tpu.pipeline_mode<synchronous>, transform_indices = @transform_3, window_bounds = array<i64: 8, 1>}, {pipeline_mode = #tpu.pipeline_mode<synchronous>, transform_indices = @transform_4, window_bounds = array<i64: 32, 64>}, {pipeline_mode = #tpu.pipeline_mode<synchronous>, transform_indices = @transform_5, window_bounds = array<i64: 64, 128>}, {pipeline_mode = #tpu.pipeline_mode<synchronous>, transform_indices = @transform_6, window_bounds = array<i64: 128, 128>}, {pipeline_mode = #tpu.pipeline_mode<synchronous>, transform_indices = @transform_7, window_bounds = array<i64: 8, 128>}, {transform_indices = @transform_8, window_bounds = array<i64: 8, 128>}]} {
    %c0 = arith.constant 0 : index
    %c0_0 = arith.constant 0 : index
    %c0_1 = arith.constant 0 : index
    %0 = vector.load %arg1[%c0, %c0_0, %c0_1] : memref<8x16x32xf32, #tpu.memory_space<vmem>>, vector<8x16x32xf32>
    %1 = vector.shape_cast %0 : vector<8x16x32xf32> to vector<128x32xf32>
    %c0_2 = arith.constant 0 : index
    %c0_3 = arith.constant 0 : index
    %2 = vector.load %arg8[%c0_2, %c0_3] : memref<8x128xf32, #tpu.memory_space<vmem>>, vector<1x16xf32>
    %c1 = arith.constant 1 : index
    %c0_4 = arith.constant 0 : index
    %3 = vector.load %arg8[%c1, %c0_4] : memref<8x128xf32, #tpu.memory_space<vmem>>, vector<1x8xf32>
    %c2 = arith.constant 2 : index
    %c0_5 = arith.constant 0 : index
    %4 = vector.load %arg8[%c2, %c0_5] : memref<8x128xf32, #tpu.memory_space<vmem>>, vector<1x1xf32>
    %c3 = arith.constant 3 : index
    %c0_6 = arith.constant 0 : index
    %5 = vector.load %arg8[%c3, %c0_6] : memref<8x128xf32, #tpu.memory_space<vmem>>, vector<1x64xf32>
    %c4 = arith.constant 4 : index
    %c0_7 = arith.constant 0 : index
    %6 = vector.load %arg8[%c4, %c0_7] : memref<8x128xf32, #tpu.memory_space<vmem>>, vector<1x128xf32>
    %c5 = arith.constant 5 : index
    %c0_8 = arith.constant 0 : index
    %7 = vector.load %arg8[%c5, %c0_8] : memref<8x128xf32, #tpu.memory_space<vmem>>, vector<1x128xf32>
    %c0_9 = arith.constant 0 : index
    %c0_10 = arith.constant 0 : index
    %8 = vector.load %arg2[%c0_9, %c0_10] : memref<32x16xf32, #tpu.memory_space<vmem>>, vector<32x16xf32>
    %cst = arith.constant dense<0.000000e+00> : vector<128x16xf32>
    %9 = tpu.matmul %1, %8, %cst {dimension_numbers = #tpu.dot_dimension_numbers<[1], [0], [0], [1], [0, 0, 1, 1], [], []>} : vector<128x32xf32>, vector<32x16xf32>, vector<128x16xf32> -> vector<128x16xf32>
    %10 = vector.broadcast %2 : vector<1x16xf32> to vector<128x16xf32>
    %11 = arith.addf %9, %10 : vector<128x16xf32>
    %12 = vector.shape_cast %11 : vector<128x16xf32> to vector<8x16x16xf32>
    %cst_11 = arith.constant dense<0.000000e+00> : vector<8x16xf32>
    %13 = vector.multi_reduction <add>, %12, %cst_11 [2] : vector<8x16x16xf32> to vector<8x16xf32>
    %14 = vector.shape_cast %13 : vector<8x16xf32> to vector<8x16x1xf32>
    %cst_12 = arith.constant dense<0.000000e+00> : vector<8x1xf32>
    %15 = vector.multi_reduction <add>, %14, %cst_12 [1] : vector<8x16x1xf32> to vector<8x1xf32>
    %16 = vector.shape_cast %15 : vector<8x1xf32> to vector<8x1x1xf32>
    %17 = arith.mulf %12, %12 : vector<8x16x16xf32>
    %cst_13 = arith.constant dense<0.000000e+00> : vector<8x16xf32>
    %18 = vector.multi_reduction <add>, %17, %cst_13 [2] : vector<8x16x16xf32> to vector<8x16xf32>
    %19 = vector.shape_cast %18 : vector<8x16xf32> to vector<8x16x1xf32>
    %cst_14 = arith.constant dense<0.000000e+00> : vector<8x1xf32>
    %20 = vector.multi_reduction <add>, %19, %cst_14 [1] : vector<8x16x1xf32> to vector<8x1xf32>
    %21 = vector.shape_cast %20 : vector<8x1xf32> to vector<8x1x1xf32>
    %cst_15 = arith.constant 3.906250e-03 : f32
    %22 = vector.broadcast %cst_15 : f32 to vector<8x1x1xf32>
    %23 = arith.mulf %16, %22 : vector<8x1x1xf32>
    %24 = arith.mulf %16, %23 : vector<8x1x1xf32>
    %25 = arith.subf %21, %24 : vector<8x1x1xf32>
    %cst_16 = arith.constant 0.000000e+00 : f32
    %26 = vector.broadcast %cst_16 : f32 to vector<8x1x1xf32>
    %27 = arith.maximumf %25, %26 : vector<8x1x1xf32>
    %cst_17 = arith.constant 0.00392156886 : f32
    %28 = vector.broadcast %cst_17 : f32 to vector<8x1x1xf32>
    %29 = arith.mulf %27, %28 : vector<8x1x1xf32>
    %30 = math.sqrt %29 : vector<8x1x1xf32>
    %cst_18 = arith.constant 1.000000e-03 : f32
    %31 = vector.broadcast %cst_18 : f32 to vector<8x1x1xf32>
    %32 = arith.addf %30, %31 : vector<8x1x1xf32>
    %cst_19 = arith.constant 1.000000e+00 : f32
    %33 = vector.broadcast %cst_19 : f32 to vector<8x1x1xf32>
    %34 = arith.divf %33, %32 : vector<8x1x1xf32>
    %35 = vector.broadcast %23 : vector<8x1x1xf32> to vector<8x16x16xf32>
    %36 = arith.subf %12, %35 : vector<8x16x16xf32>
    %37 = vector.broadcast %34 : vector<8x1x1xf32> to vector<8x16x16xf32>
    %38 = arith.mulf %36, %37 : vector<8x16x16xf32>
    %cst_20 = arith.constant 0.000000e+00 : f32
    %39 = vector.broadcast %cst_20 : f32 to vector<8x16x16xf32>
    %40 = arith.maximumf %38, %39 : vector<8x16x16xf32>
    %41 = vector.shape_cast %40 : vector<8x16x16xf32> to vector<128x16xf32>
    %c0_21 = arith.constant 0 : index
    %c0_22 = arith.constant 0 : index
    %42 = vector.load %arg3[%c0_21, %c0_22] : memref<16x8xf32, #tpu.memory_space<vmem>>, vector<16x8xf32>
    %cst_23 = arith.constant dense<0.000000e+00> : vector<128x8xf32>
    %43 = tpu.matmul %41, %42, %cst_23 {dimension_numbers = #tpu.dot_dimension_numbers<[1], [0], [0], [1], [0, 0, 1, 1], [], []>} : vector<128x16xf32>, vector<16x8xf32>, vector<128x8xf32> -> vector<128x8xf32>
    %44 = vector.broadcast %3 : vector<1x8xf32> to vector<128x8xf32>
    %45 = arith.addf %43, %44 : vector<128x8xf32>
    %46 = vector.shape_cast %45 : vector<128x8xf32> to vector<8x16x8xf32>
    %cst_24 = arith.constant dense<0.000000e+00> : vector<8x16xf32>
    %47 = vector.multi_reduction <add>, %46, %cst_24 [2] : vector<8x16x8xf32> to vector<8x16xf32>
    %48 = vector.shape_cast %47 : vector<8x16xf32> to vector<8x16x1xf32>
    %cst_25 = arith.constant dense<0.000000e+00> : vector<8x1xf32>
    %49 = vector.multi_reduction <add>, %48, %cst_25 [1] : vector<8x16x1xf32> to vector<8x1xf32>
    %50 = vector.shape_cast %49 : vector<8x1xf32> to vector<8x1x1xf32>
    %51 = arith.mulf %46, %46 : vector<8x16x8xf32>
    %cst_26 = arith.constant dense<0.000000e+00> : vector<8x16xf32>
    %52 = vector.multi_reduction <add>, %51, %cst_26 [2] : vector<8x16x8xf32> to vector<8x16xf32>
    %53 = vector.shape_cast %52 : vector<8x16xf32> to vector<8x16x1xf32>
    %cst_27 = arith.constant dense<0.000000e+00> : vector<8x1xf32>
    %54 = vector.multi_reduction <add>, %53, %cst_27 [1] : vector<8x16x1xf32> to vector<8x1xf32>
    %55 = vector.shape_cast %54 : vector<8x1xf32> to vector<8x1x1xf32>
    %cst_28 = arith.constant 7.812500e-03 : f32
    %56 = vector.broadcast %cst_28 : f32 to vector<8x1x1xf32>
    %57 = arith.mulf %50, %56 : vector<8x1x1xf32>
    %58 = arith.mulf %50, %57 : vector<8x1x1xf32>
    %59 = arith.subf %55, %58 : vector<8x1x1xf32>
    %cst_29 = arith.constant 0.000000e+00 : f32
    %60 = vector.broadcast %cst_29 : f32 to vector<8x1x1xf32>
    %61 = arith.maximumf %59, %60 : vector<8x1x1xf32>
    %cst_30 = arith.constant 0.00787401571 : f32
    %62 = vector.broadcast %cst_30 : f32 to vector<8x1x1xf32>
    %63 = arith.mulf %61, %62 : vector<8x1x1xf32>
    %64 = math.sqrt %63 : vector<8x1x1xf32>
    %cst_31 = arith.constant 1.000000e-03 : f32
    %65 = vector.broadcast %cst_31 : f32 to vector<8x1x1xf32>
    %66 = arith.addf %64, %65 : vector<8x1x1xf32>
    %cst_32 = arith.constant 1.000000e+00 : f32
    %67 = vector.broadcast %cst_32 : f32 to vector<8x1x1xf32>
    %68 = arith.divf %67, %66 : vector<8x1x1xf32>
    %69 = vector.broadcast %57 : vector<8x1x1xf32> to vector<8x16x8xf32>
    %70 = arith.subf %46, %69 : vector<8x16x8xf32>
    %71 = vector.broadcast %68 : vector<8x1x1xf32> to vector<8x16x8xf32>
    %72 = arith.mulf %70, %71 : vector<8x16x8xf32>
    %cst_33 = arith.constant 0.000000e+00 : f32
    %73 = vector.broadcast %cst_33 : f32 to vector<8x16x8xf32>
    %74 = arith.maximumf %72, %73 : vector<8x16x8xf32>
    %75 = vector.shape_cast %74 : vector<8x16x8xf32> to vector<128x8xf32>
    %c0_34 = arith.constant 0 : index
    %c0_35 = arith.constant 0 : index
    %76 = vector.load %arg4[%c0_34, %c0_35] : memref<8x1xf32, #tpu.memory_space<vmem>>, vector<8x1xf32>
    %cst_36 = arith.constant dense<0.000000e+00> : vector<128x1xf32>
    %77 = tpu.matmul %75, %76, %cst_36 {dimension_numbers = #tpu.dot_dimension_numbers<[1], [0], [0], [1], [0, 0, 1, 1], [], []>} : vector<128x8xf32>, vector<8x1xf32>, vector<128x1xf32> -> vector<128x1xf32>
    %78 = vector.broadcast %4 : vector<1x1xf32> to vector<128x1xf32>
    %79 = arith.addf %77, %78 : vector<128x1xf32>
    %80 = vector.shape_cast %79 : vector<128x1xf32> to vector<8x16x1xf32>
    %cst_37 = arith.constant dense<0.000000e+00> : vector<8x16xf32>
    %81 = vector.multi_reduction <add>, %80, %cst_37 [2] : vector<8x16x1xf32> to vector<8x16xf32>
    %82 = vector.shape_cast %81 : vector<8x16xf32> to vector<8x16x1xf32>
    %cst_38 = arith.constant dense<0.000000e+00> : vector<8x1xf32>
    %83 = vector.multi_reduction <add>, %82, %cst_38 [1] : vector<8x16x1xf32> to vector<8x1xf32>
    %84 = vector.shape_cast %83 : vector<8x1xf32> to vector<8x1x1xf32>
    %85 = arith.mulf %80, %80 : vector<8x16x1xf32>
    %cst_39 = arith.constant dense<0.000000e+00> : vector<8x16xf32>
    %86 = vector.multi_reduction <add>, %85, %cst_39 [2] : vector<8x16x1xf32> to vector<8x16xf32>
    %87 = vector.shape_cast %86 : vector<8x16xf32> to vector<8x16x1xf32>
    %cst_40 = arith.constant dense<0.000000e+00> : vector<8x1xf32>
    %88 = vector.multi_reduction <add>, %87, %cst_40 [1] : vector<8x16x1xf32> to vector<8x1xf32>
    %89 = vector.shape_cast %88 : vector<8x1xf32> to vector<8x1x1xf32>
    %cst_41 = arith.constant 6.250000e-02 : f32
    %90 = vector.broadcast %cst_41 : f32 to vector<8x1x1xf32>
    %91 = arith.mulf %84, %90 : vector<8x1x1xf32>
    %92 = arith.mulf %84, %91 : vector<8x1x1xf32>
    %93 = arith.subf %89, %92 : vector<8x1x1xf32>
    %cst_42 = arith.constant 0.000000e+00 : f32
    %94 = vector.broadcast %cst_42 : f32 to vector<8x1x1xf32>
    %95 = arith.maximumf %93, %94 : vector<8x1x1xf32>
    %cst_43 = arith.constant 0.0666666701 : f32
    %96 = vector.broadcast %cst_43 : f32 to vector<8x1x1xf32>
    %97 = arith.mulf %95, %96 : vector<8x1x1xf32>
    %98 = math.sqrt %97 : vector<8x1x1xf32>
    %cst_44 = arith.constant 1.000000e-03 : f32
    %99 = vector.broadcast %cst_44 : f32 to vector<8x1x1xf32>
    %100 = arith.addf %98, %99 : vector<8x1x1xf32>
    %cst_45 = arith.constant 1.000000e+00 : f32
    %101 = vector.broadcast %cst_45 : f32 to vector<8x1x1xf32>
    %102 = arith.divf %101, %100 : vector<8x1x1xf32>
    %103 = vector.broadcast %91 : vector<8x1x1xf32> to vector<8x16x1xf32>
    %104 = arith.subf %80, %103 : vector<8x16x1xf32>
    %105 = vector.broadcast %102 : vector<8x1x1xf32> to vector<8x16x1xf32>
    %106 = arith.mulf %104, %105 : vector<8x16x1xf32>
    %107 = vector.broadcast %106 : vector<8x16x1xf32> to vector<8x16x32xf32>
    %108 = arith.mulf %107, %0 : vector<8x16x32xf32>
    %cst_46 = arith.constant dense<0.000000e+00> : vector<8x32xf32>
    %109 = vector.multi_reduction <add>, %108, %cst_46 [1] : vector<8x16x32xf32> to vector<8x32xf32>
    %cst_47 = arith.constant dense<0.000000e+00> : vector<8xf32>
    %110 = vector.multi_reduction <add>, %109, %cst_47 [1] : vector<8x32xf32> to vector<8xf32>
    %111 = vector.shape_cast %110 : vector<8xf32> to vector<8x1xf32>
    %112 = arith.mulf %109, %109 : vector<8x32xf32>
    %cst_48 = arith.constant dense<0.000000e+00> : vector<8xf32>
    %113 = vector.multi_reduction <add>, %112, %cst_48 [1] : vector<8x32xf32> to vector<8xf32>
    %114 = vector.shape_cast %113 : vector<8xf32> to vector<8x1xf32>
    %cst_49 = arith.constant 3.125000e-02 : f32
    %115 = vector.broadcast %cst_49 : f32 to vector<8x1xf32>
    %116 = arith.mulf %111, %115 : vector<8x1xf32>
    %117 = arith.mulf %111, %116 : vector<8x1xf32>
    %118 = arith.subf %114, %117 : vector<8x1xf32>
    %cst_50 = arith.constant 0.000000e+00 : f32
    %119 = vector.broadcast %cst_50 : f32 to vector<8x1xf32>
    %120 = arith.maximumf %118, %119 : vector<8x1xf32>
    %cst_51 = arith.constant 0.0322580636 : f32
    %121 = vector.broadcast %cst_51 : f32 to vector<8x1xf32>
    %122 = arith.mulf %120, %121 : vector<8x1xf32>
    %123 = math.sqrt %122 : vector<8x1xf32>
    %cst_52 = arith.constant 1.000000e-03 : f32
    %124 = vector.broadcast %cst_52 : f32 to vector<8x1xf32>
    %125 = arith.addf %123, %124 : vector<8x1xf32>
    %cst_53 = arith.constant 1.000000e+00 : f32
    %126 = vector.broadcast %cst_53 : f32 to vector<8x1xf32>
    %127 = arith.divf %126, %125 : vector<8x1xf32>
    %128 = vector.broadcast %116 : vector<8x1xf32> to vector<8x32xf32>
    %129 = arith.subf %109, %128 : vector<8x32xf32>
    %130 = vector.broadcast %127 : vector<8x1xf32> to vector<8x32xf32>
    %131 = arith.mulf %129, %130 : vector<8x32xf32>
    %c0_54 = arith.constant 0 : index
    %c0_55 = arith.constant 0 : index
    %132 = vector.load %arg5[%c0_54, %c0_55] : memref<32x64xf32, #tpu.memory_space<vmem>>, vector<32x64xf32>
    %cst_56 = arith.constant dense<0.000000e+00> : vector<8x64xf32>
    %133 = tpu.matmul %131, %132, %cst_56 {dimension_numbers = #tpu.dot_dimension_numbers<[1], [0], [0], [1], [0, 0, 1, 1], [], []>} : vector<8x32xf32>, vector<32x64xf32>, vector<8x64xf32> -> vector<8x64xf32>
    %134 = vector.broadcast %5 : vector<1x64xf32> to vector<8x64xf32>
    %135 = arith.addf %133, %134 : vector<8x64xf32>
    %cst_57 = arith.constant dense<0.000000e+00> : vector<8xf32>
    %136 = vector.multi_reduction <add>, %135, %cst_57 [1] : vector<8x64xf32> to vector<8xf32>
    %137 = vector.shape_cast %136 : vector<8xf32> to vector<8x1xf32>
    %138 = arith.mulf %135, %135 : vector<8x64xf32>
    %cst_58 = arith.constant dense<0.000000e+00> : vector<8xf32>
    %139 = vector.multi_reduction <add>, %138, %cst_58 [1] : vector<8x64xf32> to vector<8xf32>
    %140 = vector.shape_cast %139 : vector<8xf32> to vector<8x1xf32>
    %cst_59 = arith.constant 1.562500e-02 : f32
    %141 = vector.broadcast %cst_59 : f32 to vector<8x1xf32>
    %142 = arith.mulf %137, %141 : vector<8x1xf32>
    %143 = arith.mulf %137, %142 : vector<8x1xf32>
    %144 = arith.subf %140, %143 : vector<8x1xf32>
    %cst_60 = arith.constant 0.000000e+00 : f32
    %145 = vector.broadcast %cst_60 : f32 to vector<8x1xf32>
    %146 = arith.maximumf %144, %145 : vector<8x1xf32>
    %cst_61 = arith.constant 0.0158730168 : f32
    %147 = vector.broadcast %cst_61 : f32 to vector<8x1xf32>
    %148 = arith.mulf %146, %147 : vector<8x1xf32>
    %149 = math.sqrt %148 : vector<8x1xf32>
    %cst_62 = arith.constant 1.000000e-03 : f32
    %150 = vector.broadcast %cst_62 : f32 to vector<8x1xf32>
    %151 = arith.addf %149, %150 : vector<8x1xf32>
    %cst_63 = arith.constant 1.000000e+00 : f32
    %152 = vector.broadcast %cst_63 : f32 to vector<8x1xf32>
    %153 = arith.divf %152, %151 : vector<8x1xf32>
    %154 = vector.broadcast %142 : vector<8x1xf32> to vector<8x64xf32>
    %155 = arith.subf %135, %154 : vector<8x64xf32>
    %156 = vector.broadcast %153 : vector<8x1xf32> to vector<8x64xf32>
    %157 = arith.mulf %155, %156 : vector<8x64xf32>
    %cst_64 = arith.constant 0.000000e+00 : f32
    %158 = vector.broadcast %cst_64 : f32 to vector<8x64xf32>
    %159 = arith.maximumf %157, %158 : vector<8x64xf32>
    %c0_65 = arith.constant 0 : index
    %c0_66 = arith.constant 0 : index
    %160 = vector.load %arg6[%c0_65, %c0_66] : memref<64x128xf32, #tpu.memory_space<vmem>>, vector<64x128xf32>
    %cst_67 = arith.constant dense<0.000000e+00> : vector<8x128xf32>
    %161 = tpu.matmul %159, %160, %cst_67 {dimension_numbers = #tpu.dot_dimension_numbers<[1], [0], [0], [1], [0, 0, 1, 1], [], []>} : vector<8x64xf32>, vector<64x128xf32>, vector<8x128xf32> -> vector<8x128xf32>
    %162 = vector.broadcast %6 : vector<1x128xf32> to vector<8x128xf32>
    %163 = arith.addf %161, %162 : vector<8x128xf32>
    %cst_68 = arith.constant dense<0.000000e+00> : vector<8xf32>
    %164 = vector.multi_reduction <add>, %163, %cst_68 [1] : vector<8x128xf32> to vector<8xf32>
    %165 = vector.shape_cast %164 : vector<8xf32> to vector<8x1xf32>
    %166 = arith.mulf %163, %163 : vector<8x128xf32>
    %cst_69 = arith.constant dense<0.000000e+00> : vector<8xf32>
    %167 = vector.multi_reduction <add>, %166, %cst_69 [1] : vector<8x128xf32> to vector<8xf32>
    %168 = vector.shape_cast %167 : vector<8xf32> to vector<8x1xf32>
    %cst_70 = arith.constant 7.812500e-03 : f32
    %169 = vector.broadcast %cst_70 : f32 to vector<8x1xf32>
    %170 = arith.mulf %165, %169 : vector<8x1xf32>
    %171 = arith.mulf %165, %170 : vector<8x1xf32>
    %172 = arith.subf %168, %171 : vector<8x1xf32>
    %cst_71 = arith.constant 0.000000e+00 : f32
    %173 = vector.broadcast %cst_71 : f32 to vector<8x1xf32>
    %174 = arith.maximumf %172, %173 : vector<8x1xf32>
    %cst_72 = arith.constant 0.00787401571 : f32
    %175 = vector.broadcast %cst_72 : f32 to vector<8x1xf32>
    %176 = arith.mulf %174, %175 : vector<8x1xf32>
    %177 = math.sqrt %176 : vector<8x1xf32>
    %cst_73 = arith.constant 1.000000e-03 : f32
    %178 = vector.broadcast %cst_73 : f32 to vector<8x1xf32>
    %179 = arith.addf %177, %178 : vector<8x1xf32>
    %cst_74 = arith.constant 1.000000e+00 : f32
    %180 = vector.broadcast %cst_74 : f32 to vector<8x1xf32>
    %181 = arith.divf %180, %179 : vector<8x1xf32>
    %182 = vector.broadcast %170 : vector<8x1xf32> to vector<8x128xf32>
    %183 = arith.subf %163, %182 : vector<8x128xf32>
    %184 = vector.broadcast %181 : vector<8x1xf32> to vector<8x128xf32>
    %185 = arith.mulf %183, %184 : vector<8x128xf32>
    %cst_75 = arith.constant 0.000000e+00 : f32
    %186 = vector.broadcast %cst_75 : f32 to vector<8x128xf32>
    %187 = arith.maximumf %185, %186 : vector<8x128xf32>
    %c0_76 = arith.constant 0 : index
    %c0_77 = arith.constant 0 : index
    %188 = vector.load %arg7[%c0_76, %c0_77] : memref<128x128xf32, #tpu.memory_space<vmem>>, vector<128x128xf32>
    %cst_78 = arith.constant dense<0.000000e+00> : vector<8x128xf32>
    %189 = tpu.matmul %187, %188, %cst_78 {dimension_numbers = #tpu.dot_dimension_numbers<[1], [0], [0], [1], [0, 0, 1, 1], [], []>} : vector<8x128xf32>, vector<128x128xf32>, vector<8x128xf32> -> vector<8x128xf32>
    %190 = vector.broadcast %7 : vector<1x128xf32> to vector<8x128xf32>
    %191 = arith.addf %189, %190 : vector<8x128xf32>
    %c0_79 = arith.constant 0 : index
    %c0_80 = arith.constant 0 : index
    %192 = vector.load %arg9[%c0_79, %c0_80] : memref<8x128xf32, #tpu.memory_space<vmem>>, vector<8x128xf32>
    tpu.vector_store %arg9[%c0_79, %c0_80], %191 {strides = array<i32>} : memref<8x128xf32, #tpu.memory_space<vmem>>, vector<8x128xf32>,
    return
  }
  func.func @transform_0(%arg0: i32) -> (i32, i32, i32) {
    %c0_i32 = arith.constant 0 : i32
    %c0_i32_0 = arith.constant 0 : i32
    %c0_i32_1 = arith.constant 0 : i32
    return %arg0, %c0_i32, %c0_i32_0 : i32, i32, i32
  }
  func.func @transform_1(%arg0: i32) -> (i32, i32) {
    %c0_i32 = arith.constant 0 : i32
    %c0_i32_0 = arith.constant 0 : i32
    %c0_i32_1 = arith.constant 0 : i32
    return %c0_i32, %c0_i32_0 : i32, i32
  }
  func.func @transform_2(%arg0: i32) -> (i32, i32) {
    %c0_i32 = arith.constant 0 : i32
    %c0_i32_0 = arith.constant 0 : i32
    %c0_i32_1 = arith.constant 0 : i32
    return %c0_i32, %c0_i32_0 : i32, i32
  }
  func.func @transform_3(%arg0: i32) -> (i32, i32) {
    %c0_i32 = arith.constant 0 : i32
    %c0_i32_0 = arith.constant 0 : i32
    %c0_i32_1 = arith.constant 0 : i32
    return %c0_i32, %c0_i32_0 : i32, i32
  }
  func.func @transform_4(%arg0: i32) -> (i32, i32) {
    %c0_i32 = arith.constant 0 : i32
    %c0_i32_0 = arith.constant 0 : i32
    %c0_i32_1 = arith.constant 0 : i32
    return %c0_i32, %c0_i32_0 : i32, i32
  }
  func.func @transform_5(%arg0: i32) -> (i32, i32) {
    %c0_i32 = arith.constant 0 : i32
    %c0_i32_0 = arith.constant 0 : i32
    %c0_i32_1 = arith.constant 0 : i32
    return %c0_i32, %c0_i32_0 : i32, i32
  }
  func.func @transform_6(%arg0: i32) -> (i32, i32) {
    %c0_i32 = arith.constant 0 : i32
    %c0_i32_0 = arith.constant 0 : i32
    %c0_i32_1 = arith.constant 0 : i32
    return %c0_i32, %c0_i32_0 : i32, i32
  }
  func.func @transform_7(%arg0: i32) -> (i32, i32) {
    %c0_i32 = arith.constant 0 : i32
    %c0_i32_0 = arith.constant 0 : i32
    %c0_i32_1 = arith.constant 0 : i32
    return %c0_i32, %c0_i32_0 : i32, i32
  }
  func.func @transform_8(%arg0: i32) -> (i32, i32) {
    %c0_i32 = arith.constant 0 : i32
    %c0_i32_0 = arith.constant 0 : i32
    return %arg0, %c0_i32 : i32, i32
  }
}

</mosaic_0001>

<llo_original>
// kernel: tpu_custom_call.1
$region0: #{tpu_custom_call.1}
  #allocation0 [shape = 'u32[]', space=smem, size = 0x4, offset = 0x4, fixed_abs, tag = 'smem constant byte address 0x4 - core index']
  #allocation1 [shape = 'u32[144,128]{1,0:T(1,128)}', space=vmem, size = 0x12000, scoped, tag = 'internal scratch']
  %s0 = inlined_call_operand.hbm [shape: f32[16,16,32], index: 0, kind: input, shape index: {}]
  %s1 = inlined_call_operand.vmem [shape: f32[32,16], index: 1, kind: input, shape index: {}]
  %s2 = inlined_call_operand.vmem [shape: f32[16,8], index: 2, kind: input, shape index: {}]
  %s3 = inlined_call_operand.vmem [shape: f32[8,1], index: 3, kind: input, shape index: {}]
  %s4 = inlined_call_operand.hbm [shape: f32[32,64], index: 4, kind: input, shape index: {}]
  %s5 = inlined_call_operand.vmem [shape: f32[64,128], index: 5, kind: input, shape index: {}]
  %s6 = inlined_call_operand.hbm [shape: f32[128,128], index: 6, kind: input, shape index: {}]
  %s7 = inlined_call_operand.vmem [shape: f32[8,128], index: 7, kind: input, shape index: {}]
  %s8 = inlined_call_operand.hbm [shape: f32[16,128], index: 8, kind: output, shape index: {}]
  %s9 = sld [smem:[#allocation0]]
  $region77: #{tpu_custom_call.1} parent=0
    _
  %s11 = ssub.s32 1, %s9
  %s12 = scalar_select 0, %s11, %s9
  $region1: #{tpu_custom_call.1} parent=0
    #allocation2 [shape = 'u8[131072]{0}', space=vmem, size = 0x20000, scoped, tag = 'input window, operand 0']
    #allocation3 [shape = 's32[2]{0}', space=sflag, size = 0x8, scoped, tag = 'scoped memory for tpu_custom_call.1']
    #allocation4 [shape = 's32[2]{0}', space=sflag, size = 0x8, scoped, tag = 'scoped memory for tpu_custom_call.1']
    #allocation5 [shape = 'u8[16384]{0}', space=vmem, size = 0x4000, scoped, tag = 'input window, operand 4, single buffered']
    #allocation6 [shape = 's32[1]{0}', space=sflag, size = 0x4, scoped, tag = 'scoped memory for tpu_custom_call.1']
    #allocation7 [shape = 'u8[65536]{0}', space=vmem, size = 0x10000, scoped, tag = 'input window, operand 6, single buffered']
    #allocation8 [shape = 'u8[8192]{0}', space=vmem, size = 0x2000, scoped, tag = 'output window, operand 0']
    %13 = vsyncpa [#allocation3], 0
    %s14 = scalar_lea.sflag [#allocation3], 1
    %15 = vsyncpa %s14, 0
    %16 = vsyncpa [#allocation6], 0
    %17 = vsyncpa [#allocation4], 0
    %s18 = scalar_lea.sflag [#allocation4], 1
    %19 = vsyncpa %s18, 0
    loop: start=0, step=1, limit=4
    $region2: #{tpu_custom_call.1} parent=1 // loop_pre_header
      _
    $region3: #{tpu_custom_call.1} parent=1 // loop_header
      %s21 = sphi 0, %s25
      %p22 = scmp.ge.s32.totalorder %s21, 4
      %s31 = sphi 0, %s33
      %s34 = sphi 0, %s31
      %s35 = sphi 0, %s34
      %s51 = sphi 0, %s35
      %s55 = sphi 0, %s55
      %s57 = sphi 0, %s55
      %s58 = sphi 0, %s57
      %s72 = sphi 0, %s58
      %s76 = sphi 0, %s76
      %s78 = sphi 0, %s76
      %s79 = sphi 0, %s78
      %s93 = sphi 0, %s79
      %s97 = sphi 0, %s97
      %s99 = sphi 0, %s97
      %s100 = sphi 0, %s99
      %s114 = sphi 0, %s100
      %s118 = sphi 0, %s118
      %s120 = sphi 0, %s118
      %s121 = sphi 0, %s120
      %s135 = sphi 0, %s121
      %s139 = sphi 0, %s139
      %s141 = sphi 0, %s139
      %s142 = sphi 0, %s141
      %s156 = sphi 0, %s142
      %s160 = sphi 0, %s160
      %s162 = sphi 0, %s160
      %s163 = sphi 0, %s162
      %s177 = sphi 0, %s163
      %s181 = sphi 0, %s181
      %s183 = sphi 0, %s181
      %s184 = sphi 0, %s183
      %s198 = sphi 0, %s184
      %s204 = sphi 0, %s206
      %s207 = sphi 0, %s204
      %s208 = sphi 0, %s207
      %s224 = sphi 0, %s208
    $region4: #{tpu_custom_call.1} parent=1 // loop_header_branch
      %24 = sbr.rel (%p22) target = $region8
    $region5: #{tpu_custom_call.1} parent=1 // loop_body
      %s26 = ssub.s32 %s21, 1
      %s27 = ssub.s32 %s21, 2
      %s28 = sadd.s32 %s21, 1
      %s29 = ssub.s32 %s21, %s28
      %p30 = scmp.eq.s32.totalorder %s29, 0
      %s32 = sadd.s32 %s31, 1
      %s33 = scalar_select %p30, %s31, %s32
      %p36 = pneg %p30
      %p37 = scmp.eq.s32.totalorder %s21, 1
      %p38 = por %p36, %p37
      %p39 = scmp.ne.s32.totalorder %s31, %s34
      %p40 = scmp.eq.s32.totalorder %s21, 0
      %p41 = por %p39, %p40
      %p42 = scmp.ne.s32.totalorder %s31, %s34
      %p43 = scmp.eq.s32.totalorder %s26, 1
      %p44 = por %p42, %p43
      %p45 = scmp.ne.s32.totalorder %s34, %s35
      %p46 = scmp.eq.s32.totalorder %s26, 0
      %p47 = por %p45, %p46
      %p48 = scmp.ne.s32.totalorder %s34, %s35
      %p49 = scmp.eq.s32.totalorder %s27, 1
      %p50 = por %p48, %p49
      %p52 = scmp.ne.s32.totalorder %s35, %s51
      %p53 = scmp.eq.s32.totalorder %s27, 0
      %p54 = por %p52, %p53
      %s56 = sadd.s32 %s55, 1
      %p59 = scmp.eq.s32.totalorder %s21, 1
      %p60 = scmp.ne.s32.totalorder %s55, %s57
      %p61 = scmp.eq.s32.totalorder %s21, 0
      %p62 = por %p60, %p61
      %p63 = scmp.ne.s32.totalorder %s55, %s57
      %p64 = scmp.eq.s32.totalorder %s26, 1
      %p65 = por %p63, %p64
      %p66 = scmp.ne.s32.totalorder %s57, %s58
      %p67 = scmp.eq.s32.totalorder %s26, 0
      %p68 = por %p66, %p67
      %p69 = scmp.ne.s32.totalorder %s57, %s58
      %p70 = scmp.eq.s32.totalorder %s27, 1
      %p71 = por %p69, %p70
      %p73 = scmp.ne.s32.totalorder %s58, %s72
      %p74 = scmp.eq.s32.totalorder %s27, 0
      %p75 = por %p73, %p74
      %s77 = sadd.s32 %s76, 1
      %p80 = scmp.eq.s32.totalorder %s21, 1
      %p81 = scmp.ne.s32.totalorder %s76, %s78
      %p82 = scmp.eq.s32.totalorder %s21, 0
      %p83 = por %p81, %p82
      %p84 = scmp.ne.s32.totalorder %s76, %s78
      %p85 = scmp.eq.s32.totalorder %s26, 1
      %p86 = por %p84, %p85
      %p87 = scmp.ne.s32.totalorder %s78, %s79
      %p88 = scmp.eq.s32.totalorder %s26, 0
      %p89 = por %p87, %p88
      %p90 = scmp.ne.s32.totalorder %s78, %s79
      %p91 = scmp.eq.s32.totalorder %s27, 1
      %p92 = por %p90, %p91
      %p94 = scmp.ne.s32.totalorder %s79, %s93
      %p95 = scmp.eq.s32.totalorder %s27, 0
      %p96 = por %p94, %p95
      %s98 = sadd.s32 %s97, 1
      %p101 = scmp.eq.s32.totalorder %s21, 1
      %p102 = scmp.ne.s32.totalorder %s97, %s99
      %p103 = scmp.eq.s32.totalorder %s21, 0
      %p104 = por %p102, %p103
      %p105 = scmp.ne.s32.totalorder %s97, %s99
      %p106 = scmp.eq.s32.totalorder %s26, 1
      %p107 = por %p105, %p106
      %p108 = scmp.ne.s32.totalorder %s99, %s100
      %p109 = scmp.eq.s32.totalorder %s26, 0
      %p110 = por %p108, %p109
      %p111 = scmp.ne.s32.totalorder %s99, %s100
      %p112 = scmp.eq.s32.totalorder %s27, 1
      %p113 = por %p111, %p112
      %p115 = scmp.ne.s32.totalorder %s100, %s114
      %p116 = scmp.eq.s32.totalorder %s27, 0
      %p117 = por %p115, %p116
      %s119 = sadd.s32 %s118, 1
      %p122 = scmp.eq.s32.totalorder %s21, 1
      %p123 = scmp.ne.s32.totalorder %s118, %s120
      %p124 = scmp.eq.s32.totalorder %s21, 0
      %p125 = por %p123, %p124
      %p126 = scmp.ne.s32.totalorder %s118, %s120
      %p127 = scmp.eq.s32.totalorder %s26, 1
      %p128 = por %p126, %p127
      %p129 = scmp.ne.s32.totalorder %s120, %s121
      %p130 = scmp.eq.s32.totalorder %s26, 0
      %p131 = por %p129, %p130
      %p132 = scmp.ne.s32.totalorder %s120, %s121
      %p133 = scmp.eq.s32.totalorder %s27, 1
      %p134 = por %p132, %p133
      %p136 = scmp.ne.s32.totalorder %s121, %s135
      %p137 = scmp.eq.s32.totalorder %s27, 0
      %p138 = por %p136, %p137
      %s140 = sadd.s32 %s139, 1
      %p143 = scmp.eq.s32.totalorder %s21, 1
      %p144 = scmp.ne.s32.totalorder %s139, %s141
      %p145 = scmp.eq.s32.totalorder %s21, 0
      %p146 = por %p144, %p145
      %p147 = scmp.ne.s32.totalorder %s139, %s141
      %p148 = scmp.eq.s32.totalorder %s26, 1
      %p149 = por %p147, %p148
      %p150 = scmp.ne.s32.totalorder %s141, %s142
      %p151 = scmp.eq.s32.totalorder %s26, 0
      %p152 = por %p150, %p151
      %p153 = scmp.ne.s32.totalorder %s141, %s142
      %p154 = scmp.eq.s32.totalorder %s27, 1
      %p155 = por %p153, %p154
      %p157 = scmp.ne.s32.totalorder %s142, %s156
      %p158 = scmp.eq.s32.totalorder %s27, 0
      %p159 = por %p157, %p158
      %s161 = sadd.s32 %s160, 1
      %p164 = scmp.eq.s32.totalorder %s21, 1
      %p165 = scmp.ne.s32.totalorder %s160, %s162
      %p166 = scmp.eq.s32.totalorder %s21, 0
      %p167 = por %p165, %p166
      %p168 = scmp.ne.s32.totalorder %s160, %s162
      %p169 = scmp.eq.s32.totalorder %s26, 1
      %p170 = por %p168, %p169
      %p171 = scmp.ne.s32.totalorder %s162, %s163
      %p172 = scmp.eq.s32.totalorder %s26, 0
      %p173 = por %p171, %p172
      %p174 = scmp.ne.s32.totalorder %s162, %s163
      %p175 = scmp.eq.s32.totalorder %s27, 1
      %p176 = por %p174, %p175
      %p178 = scmp.ne.s32.totalorder %s163, %s177
      %p179 = scmp.eq.s32.totalorder %s27, 0
      %p180 = por %p178, %p179
      %s182 = sadd.s32 %s181, 1
      %p185 = scmp.eq.s32.totalorder %s21, 1
      %p186 = scmp.ne.s32.totalorder %s181, %s183
      %p187 = scmp.eq.s32.totalorder %s21, 0
      %p188 = por %p186, %p187
      %p189 = scmp.ne.s32.totalorder %s181, %s183
      %p190 = scmp.eq.s32.totalorder %s26, 1
      %p191 = por %p189, %p190
      %p192 = scmp.ne.s32.totalorder %s183, %s184
      %p193 = scmp.eq.s32.totalorder %s26, 0
      %p194 = por %p192, %p193
      %p195 = scmp.ne.s32.totalorder %s183, %s184
      %p196 = scmp.eq.s32.totalorder %s27, 1
      %p197 = por %p195, %p196
      %p199 = scmp.ne.s32.totalorder %s184, %s198
      %p200 = scmp.eq.s32.totalorder %s27, 0
      %p201 = por %p199, %p200
      %s202 = ssub.s32 %s21, %s28
      %p203 = scmp.eq.s32.totalorder %s202, 0
      %s205 = sadd.s32 %s204, 1
      %s206 = scalar_select %p203, %s204, %s205
      %p209 = pneg %p203
      %p210 = scmp.eq.s32.totalorder %s21, 1
      %p211 = por %p209, %p210
      %p212 = scmp.ne.s32.totalorder %s204, %s207
      %p213 = scmp.eq.s32.totalorder %s21, 0
      %p214 = por %p212, %p213
      %p215 = scmp.ne.s32.totalorder %s204, %s207
      %p216 = scmp.eq.s32.totalorder %s26, 1
      %p217 = por %p215, %p216
      %p218 = scmp.ne.s32.totalorder %s207, %s208
      %p219 = scmp.eq.s32.totalorder %s26, 0
      %p220 = por %p218, %p219
      %p221 = scmp.ne.s32.totalorder %s207, %s208
      %p222 = scmp.eq.s32.totalorder %s27, 1
      %p223 = por %p221, %p222
      %p225 = scmp.ne.s32.totalorder %s208, %s224
      %p226 = scmp.eq.s32.totalorder %s27, 0
      %p227 = por %p225, %p226
      %p228 = scmp.le.s32.totalorder 1, %s21
      %p229 = scmp.lt.s32.totalorder %s21, 3
      %p230 = pnand %p228, %p229
      %p231 = pneg %p230
      // Predicated region
      $region9: #{tpu_custom_call.1} parent=5 // pred_check
        _
      $region10: #{tpu_custom_call.1} parent=5 // pred_check_branch
        %233 = sbr.rel (%p230) target = $region12
      $region11: #{tpu_custom_call.1} parent=5 // pred_region
        %s234 = ssub.s32 %s21, 1
        // Predicated region
        $region13: #{tpu_custom_call.1} parent=11 // pred_check
          %p235 = pneg %p68
        $region14: #{tpu_custom_call.1} parent=11 // pred_check_branch
          %237 = sbr.rel (%p235) target = $region16
        $region15: #{tpu_custom_call.1} parent=11 // pred_region
          _
        $region16: #{tpu_custom_call.1} parent=11 // pred_fallthru
          _
        // Predicated region
        $region17: #{tpu_custom_call.1} parent=11 // pred_check
          %p238 = pneg %p89
        $region18: #{tpu_custom_call.1} parent=11 // pred_check_branch
          %240 = sbr.rel (%p238) target = $region20
        $region19: #{tpu_custom_call.1} parent=11 // pred_region
          _
        $region20: #{tpu_custom_call.1} parent=11 // pred_fallthru
          _
        // Predicated region
        $region21: #{tpu_custom_call.1} parent=11 // pred_check
          %p241 = pneg %p110
        $region22: #{tpu_custom_call.1} parent=11 // pred_check_branch
          %243 = sbr.rel (%p241) target = $region24
        $region23: #{tpu_custom_call.1} parent=11 // pred_region
          _
        $region24: #{tpu_custom_call.1} parent=11 // pred_fallthru
          _
        // Predicated region
        $region25: #{tpu_custom_call.1} parent=11 // pred_check
          %p244 = pneg %p131
        $region26: #{tpu_custom_call.1} parent=11 // pred_check_branch
          %246 = sbr.rel (%p244) target = $region28
        $region27: #{tpu_custom_call.1} parent=11 // pred_region
          %s248 = ssub.s32 512, 512
          %249 = vsyncadd [#allocation6], %s248
          %s250 = sshll.u32 [#allocation5], 4
          %s251 = int_to_ptr.vmem [resolvable:$true] %s250
          %256 = dma.hbm_to_vmem [thread:$0]  %s4, 512, %s251, [#allocation6], 128, 128, 8
        $region28: #{tpu_custom_call.1} parent=11 // pred_fallthru
          _
        // Predicated region
        $region29: #{tpu_custom_call.1} parent=11 // pred_check
          %p257 = pneg %p152
        $region30: #{tpu_custom_call.1} parent=11 // pred_check_branch
          %259 = sbr.rel (%p257) target = $region32
        $region31: #{tpu_custom_call.1} parent=11 // pred_region
          _
        $region32: #{tpu_custom_call.1} parent=11 // pred_fallthru
          _
        // Predicated region
        $region33: #{tpu_custom_call.1} parent=11 // pred_check
          %p260 = pneg %p173
        $region34: #{tpu_custom_call.1} parent=11 // pred_check_branch
          %262 = sbr.rel (%p260) target = $region36
        $region35: #{tpu_custom_call.1} parent=11 // pred_region
          %s264 = ssub.s32 2048, 2048
          %265 = vsyncadd [#allocation6], %s264
          %s266 = sshll.u32 [#allocation7], 4
          %s267 = int_to_ptr.vmem [resolvable:$true] %s266
          %272 = dma.hbm_to_vmem [thread:$0]  %s6, 2048, %s267, [#allocation6], 128, 128, 8
        $region36: #{tpu_custom_call.1} parent=11 // pred_fallthru
          _
        // Predicated region
        $region37: #{tpu_custom_call.1} parent=11 // pred_check
          %p273 = pneg %p194
        $region38: #{tpu_custom_call.1} parent=11 // pred_check_branch
          %275 = sbr.rel (%p273) target = $region40
        $region39: #{tpu_custom_call.1} parent=11 // pred_region
          _
        $region40: #{tpu_custom_call.1} parent=11 // pred_fallthru
          _
      $region12: #{tpu_custom_call.1} parent=5 // pred_fallthru
        _
      %p276 = scmp.lt.s32.totalorder %s21, 2
      // Predicated region
      $region41: #{tpu_custom_call.1} parent=5 // pred_check
        %p277 = pneg %p276
      $region42: #{tpu_custom_call.1} parent=5 // pred_check_branch
        %279 = sbr.rel (%p277) target = $region44
      $region43: #{tpu_custom_call.1} parent=5 // pred_region
        // Predicated region
        $region45: #{tpu_custom_call.1} parent=43 // pred_check
          %p280 = pneg %p41
        $region46: #{tpu_custom_call.1} parent=43 // pred_check_branch
          %282 = sbr.rel (%p280) target = $region48
        $region47: #{tpu_custom_call.1} parent=43 // pred_region
          %s283 = sand.u32 %s31, 1
          %s284 = scalar_lea.sflag [#allocation3], %s283
          %s285 = sand.u32 %s31, 1
          %s286 = smul.addr %s285, 128
          %s287 = scalar_lea.vmem [#allocation2], %s286
          %s288 = smul.u32 8, %s21
          %s290 = ssub.s32 2048, 2048
          %291 = vsyncadd %s284, %s290
          %s292 = smul.addr %s288, 2
          %s293 = smul.addr %s292, 128
          %s294 = scalar_lea.hbm %s0, %s293
          %s295 = sshll.u32 %s287, 4
          %s296 = int_to_ptr.vmem [resolvable:$true] %s295
          %301 = dma.hbm_to_vmem [thread:$0]  %s294, 2048, %s296, %s284, 128, 128, 8
        $region48: #{tpu_custom_call.1} parent=43 // pred_fallthru
          _
      $region44: #{tpu_custom_call.1} parent=5 // pred_fallthru
        _
      %p302 = scmp.le.s32.totalorder 1, %s21
      %p303 = scmp.lt.s32.totalorder %s21, 3
      %p304 = pnand %p302, %p303
      %p305 = pneg %p304
      // Predicated region
      $region49: #{tpu_custom_call.1} parent=5 // pred_check
        _
      $region50: #{tpu_custom_call.1} parent=5 // pred_check_branch
        %307 = sbr.rel (%p304) target = $region52
      $region51: #{tpu_custom_call.1} parent=5 // pred_region
        %s308 = ssub.s32 %s21, 1
        %s309 = sand.u32 %s34, 1
        %s310 = scalar_lea.sflag [#allocation3], %s309
        %s311 = sand.u32 %s34, 1
        %s312 = smul.addr %s311, 128
        %s313 = scalar_lea.vmem [#allocation2], %s312
        // Predicated region
        $region53: #{tpu_custom_call.1} parent=51 // pred_check
          %p314 = pneg %p47
        $region54: #{tpu_custom_call.1} parent=51 // pred_check_branch
          %316 = sbr.rel (%p314) target = $region56
        $region55: #{tpu_custom_call.1} parent=51 // pred_region
          %317 = dma.done %s310, 2048
        $region56: #{tpu_custom_call.1} parent=51 // pred_fallthru
          _
        // Predicated region
        $region57: #{tpu_custom_call.1} parent=51 // pred_check
          %p318 = pneg %p131
        $region58: #{tpu_custom_call.1} parent=51 // pred_check_branch
          %320 = sbr.rel (%p318) target = $region60
        $region59: #{tpu_custom_call.1} parent=51 // pred_region
          %321 = dma.done [#allocation6], 512
        $region60: #{tpu_custom_call.1} parent=51 // pred_fallthru
          _
        // Predicated region
        $region61: #{tpu_custom_call.1} parent=51 // pred_check
          %p322 = pneg %p173
        $region62: #{tpu_custom_call.1} parent=51 // pred_check_branch
          %324 = sbr.rel (%p322) target = $region64
        $region63: #{tpu_custom_call.1} parent=51 // pred_region
          %325 = dma.done [#allocation6], 2048
        $region64: #{tpu_custom_call.1} parent=51 // pred_fallthru
          _
        %s326 = sand.u32 %s34, 1
        %s327 = scalar_lea.sflag [#allocation3], %s326
        %s328 = sand.u32 %s34, 1
        %s329 = smul.addr %s328, 128
        %s330 = scalar_lea.vmem [#allocation2], %s329
        %p331 = pneg %p47
        %p332 = pneg %p44
        %p333 = pneg %p68
        %p334 = pneg %p65
        %p335 = pneg %p89
        %p336 = pneg %p86
        %p337 = pneg %p110
        %p338 = pneg %p107
        %p339 = pneg %p131
        %p340 = pneg %p128
        %p341 = pneg %p152
        %p342 = pneg %p149
        %p343 = pneg %p173
        %p344 = pneg %p170
        %p345 = pneg %p194
        %p346 = pneg %p191
        %p347 = pneg %p220
        %p348 = pneg %p217
        %s349 = sand.u32 %s207, 1
        %s350 = scalar_lea.sflag [#allocation4], %s349
        %s351 = sand.u32 %s207, 1
        %s352 = smul.addr %s351, 8
        %s353 = scalar_lea.vmem [#allocation8], %s352
        %s354 = smul.u32 8, %s26
        %v355 = vld [vmem:[%s313] sm:$0xff]
        %v356 = vld [vmem:[%s313 + $0x8] sm:$0xff]
        %v357 = vld [vmem:[%s313 + $0x10] sm:$0xff]
        %v358 = vld [vmem:[%s313 + $0x18] sm:$0xff]
        %v359 = vld [vmem:[%s313 + $0x20] sm:$0xff]
        %v360 = vld [vmem:[%s313 + $0x28] sm:$0xff]
        %v361 = vld [vmem:[%s313 + $0x30] sm:$0xff]
        %v362 = vld [vmem:[%s313 + $0x38] sm:$0xff]
        %v363 = vld [vmem:[%s313 + $0x40] sm:$0xff]
        %v364 = vld [vmem:[%s313 + $0x48] sm:$0xff]
        %v365 = vld [vmem:[%s313 + $0x50] sm:$0xff]
        %v366 = vld [vmem:[%s313 + $0x58] sm:$0xff]
        %v367 = vld [vmem:[%s313 + $0x60] sm:$0xff]
        %v368 = vld [vmem:[%s313 + $0x68] sm:$0xff]
        %v369 = vld [vmem:[%s313 + $0x70] sm:$0xff]
        %v370 = vld [vmem:[%s313 + $0x78] sm:$0xff]
        %v371 = vld [vmem:[%s7] sm:$0x1]
        %v372 = vld [vmem:[%s7 + $0x1] sm:$0x1]
        %v373 = vld [vmem:[%s7 + $0x2] sm:$0x1]
        %v374 = vld [vmem:[%s7 + $0x3] sm:$0x1]
        %v375 = vld [vmem:[%s7 + $0x4] sm:$0x1]
        %v376 = vld [vmem:[%s7 + $0x5] sm:$0x1]
        %v377 = vld [vmem:[%s1] sm:$0xff]
        %v378 = vld [vmem:[%s1 + $0x8] sm:$0xff]
        %v379 = vld [vmem:[%s1 + $0x10] sm:$0xff]
        %v380 = vld [vmem:[%s1 + $0x18] sm:$0xff]
        %v381 = vlaneseq
        %v382 = vshrl.u32 %v381, 7
        %v383 = vsub.s32 0, %v382
        %v384 = vrot.slane %v371, %v383
        %vm385 = vcmask 261120
        %v387 = vsel %vm385, %v355, 0
        %v390 = vsel %vm385, %v356, 0
        %v393 = vsel %vm385, %v357, 0
        %v396 = vsel %vm385, %v358, 0
        %v399 = vsel %vm385, %v359, 0
        %v402 = vsel %vm385, %v360, 0
        %v405 = vsel %vm385, %v361, 0
        %v408 = vsel %vm385, %v362, 0
        %v411 = vsel %vm385, %v363, 0
        %v414 = vsel %vm385, %v364, 0
        %v417 = vsel %vm385, %v365, 0
        %v420 = vsel %vm385, %v366, 0
        %v423 = vsel %vm385, %v367, 0
        %v426 = vsel %vm385, %v368, 0
        %v429 = vsel %vm385, %v369, 0
        %v432 = vsel %vm385, %v370, 0
        %434 = vmatprep.subr.mxu0 0.0
        %435 = vmatpush1.msra.mxu0 0.0
        %436 = vmatprep.subr.mxu0 0.0
        %437 = vmatpush1.msra.mxu0 0.0
        %438 = vmatprep.subr.mxu0 0.0
        %439 = vmatpush1.msra.mxu0 0.0
        %440 = vmatprep.subr.mxu0 0.0
        %441 = vmatpush1.msra.mxu0 0.0
        %442 = vmatprep.subr.mxu0 0.0
        %443 = vmatpush1.msra.mxu0 0.0
        %444 = vmatprep.subr.mxu0 0.0
        %445 = vmatpush1.msra.mxu0 0.0
        %446 = vmatprep.subr.mxu0 0.0
        %447 = vmatpush1.msra.mxu0 0.0
        %448 = vmatprep.subr.mxu0 0.0
        %449 = vmatpush1.msra.mxu0 0.0
        %450 = vmatprep.subr.mxu0 0.0
        %451 = vmatpush1.msra.mxu0 0.0
        %452 = vmatprep.subr.mxu0 0.0
        %453 = vmatpush1.msra.mxu0 0.0
        %454 = vmatprep.subr.mxu0 0.0
        %455 = vmatpush1.msra.mxu0 0.0
        %456 = vmatprep.subr.mxu0 0.0
        %457 = vmatpush1.msra.mxu0 0.0
        %458 = vmatprep.subr.mxu0 0.0
        %459 = vmatpush1.msra.mxu0 %v380
        %460 = vmatprep.subr.mxu0 0.0
        %461 = vmatpush1.msra.mxu0 %v379
        %462 = vmatprep.subr.mxu0 0.0
        %463 = vmatpush1.msra.mxu0 %v378
        %464 = vmatprep.subr.mxu0 0.0
        %465 = vmatpush1.msra.mxu0 %v377
        %466 = vmatprep.subr.mxu0 0.0
        %467 = vmatpush2.msra.mxu0 0.0
        %468 = vmatprep.subr.mxu0 0.0
        %469 = vmatpush2.msra.mxu0 0.0
        %470 = vmatprep.subr.mxu0 0.0
        %471 = vmatpush2.msra.mxu0 0.0
        %472 = vmatprep.subr.mxu0 0.0
        %473 = vmatpush2.msra.mxu0 0.0
        %474 = vmatprep.subr.mxu0 0.0
        %475 = vmatpush2.msra.mxu0 0.0
        %476 = vmatprep.subr.mxu0 0.0
        %477 = vmatpush2.msra.mxu0 0.0
        %478 = vmatprep.subr.mxu0 0.0
        %479 = vmatpush2.msra.mxu0 0.0
        %480 = vmatprep.subr.mxu0 0.0
        %481 = vmatpush2.msra.mxu0 0.0
        %482 = vmatprep.subr.mxu0 0.0
        %483 = vmatpush2.msra.mxu0 0.0
        %484 = vmatprep.subr.mxu0 0.0
        %485 = vmatpush2.msra.mxu0 0.0
        %486 = vmatprep.subr.mxu0 0.0
        %487 = vmatpush2.msra.mxu0 0.0
        %488 = vmatprep.subr.mxu0 0.0
        %489 = vmatpush2.msra.mxu0 0.0
        %490 = vmatprep.subr.mxu0 0.0
        %491 = vmatpush2.msra.mxu0 0.0
        %492 = vmatprep.subr.mxu0 0.0
        %493 = vmatpush2.msra.mxu0 0.0
        %494 = vmatprep.subr.mxu0 0.0
        %495 = vmatpush2.msra.mxu0 0.0
        %496 = vmatprep.subr.mxu0 0.0
        %497 = vmatpush2.msra.mxu0 0.0
        %498 = vmatprep.mubr.f32.mxu0 0.0
        %499 = vmatmul.mubr.f32.gmra.mxu0 %v387
        %v500 = vpop.f32.mrf.mxu0
        %v501 = vadd.f32 %v384, %v500
        %v502 = vpop.f32.mrf.mxu0
        %503 = vmatprep.mubr.f32.mxu0 0.0
        %504 = vmatmul.mubr.f32.gmra.mxu0 %v390
        %v505 = vpop.f32.mrf.mxu0
        %v506 = vadd.f32 %v384, %v505
        %v507 = vpop.f32.mrf.mxu0
        %508 = vmatprep.mubr.f32.mxu0 0.0
        %509 = vmatmul.mubr.f32.gmra.mxu0 %v393
        %v510 = vpop.f32.mrf.mxu0
        %v511 = vadd.f32 %v384, %v510
        %v512 = vpop.f32.mrf.mxu0
        %513 = vmatprep.mubr.f32.mxu0 0.0
        %514 = vmatmul.mubr.f32.gmra.mxu0 %v396
        %v515 = vpop.f32.mrf.mxu0
        %v516 = vadd.f32 %v384, %v515
        %v517 = vpop.f32.mrf.mxu0
        %518 = vmatprep.mubr.f32.mxu0 0.0
        %519 = vmatmul.mubr.f32.gmra.mxu0 %v399
        %v520 = vpop.f32.mrf.mxu0
        %v521 = vadd.f32 %v384, %v520
        %v522 = vpop.f32.mrf.mxu0
        %523 = vmatprep.mubr.f32.mxu0 0.0
        %524 = vmatmul.mubr.f32.gmra.mxu0 %v402
        %v525 = vpop.f32.mrf.mxu0
        %v526 = vadd.f32 %v384, %v525
        %v527 = vpop.f32.mrf.mxu0
        %528 = vmatprep.mubr.f32.mxu0 0.0
        %529 = vmatmul.mubr.f32.gmra.mxu0 %v405
        %v530 = vpop.f32.mrf.mxu0
        %v531 = vadd.f32 %v384, %v530
        %v532 = vpop.f32.mrf.mxu0
        %533 = vmatprep.mubr.f32.mxu0 0.0
        %534 = vmatmul.mubr.f32.gmra.mxu0 %v408
        %v535 = vpop.f32.mrf.mxu0
        %v536 = vadd.f32 %v384, %v535
        %v537 = vpop.f32.mrf.mxu0
        %538 = vmatprep.mubr.f32.mxu0 0.0
        %539 = vmatmul.mubr.f32.gmra.mxu0 %v411
        %v540 = vpop.f32.mrf.mxu0
        %v541 = vadd.f32 %v384, %v540
        %v542 = vpop.f32.mrf.mxu0
        %543 = vmatprep.mubr.f32.mxu0 0.0
        %544 = vmatmul.mubr.f32.gmra.mxu0 %v414
        %v545 = vpop.f32.mrf.mxu0
        %v546 = vadd.f32 %v384, %v545
        %v547 = vpop.f32.mrf.mxu0
        %548 = vmatprep.mubr.f32.mxu0 0.0
        %549 = vmatmul.mubr.f32.gmra.mxu0 %v417
        %v550 = vpop.f32.mrf.mxu0
        %v551 = vadd.f32 %v384, %v550
        %v552 = vpop.f32.mrf.mxu0
        %553 = vmatprep.mubr.f32.mxu0 0.0
        %554 = vmatmul.mubr.f32.gmra.mxu0 %v420
        %v555 = vpop.f32.mrf.mxu0
        %v556 = vadd.f32 %v384, %v555
        %v557 = vpop.f32.mrf.mxu0
        %558 = vmatprep.mubr.f32.mxu0 0.0
        %559 = vmatmul.mubr.f32.gmra.mxu0 %v423
        %v560 = vpop.f32.mrf.mxu0
        %v561 = vadd.f32 %v384, %v560
        %v562 = vpop.f32.mrf.mxu0
        %563 = vmatprep.mubr.f32.mxu0 0.0
        %564 = vmatmul.mubr.f32.gmra.mxu0 %v426
        %v565 = vpop.f32.mrf.mxu0
        %v566 = vadd.f32 %v384, %v565
        %v567 = vpop.f32.mrf.mxu0
        %568 = vmatprep.mubr.f32.mxu0 0.0
        %569 = vmatmul.mubr.f32.gmra.mxu0 %v429
        %v570 = vpop.f32.mrf.mxu0
        %v571 = vadd.f32 %v384, %v570
        %v572 = vpop.f32.mrf.mxu0
        %573 = vmatprep.mubr.f32.mxu0 0.0
        %574 = vmatmul.mubr.f32.gmra.mxu0 %v432
        %v575 = vpop.f32.mrf.mxu0
        %v576 = vadd.f32 %v384, %v575
        %v577 = vpop.f32.mrf.mxu0
        %578 = vdwg.mxu0
        %vm579 = vcmask 130048
        %v580 = vsel %vm579, %v501, 0.0
        %581 = vadd.xlane.f32.xlu0 %v580
        %v582 = vpop.xlane.xlu0 %581
        %v583 = vsel %vm579, %v506, 0.0
        %584 = vadd.xlane.f32.xlu0 %v583
        %v585 = vpop.xlane.xlu0 %584
        %v586 = vsel %vm579, %v511, 0.0
        %587 = vadd.xlane.f32.xlu0 %v586
        %v588 = vpop.xlane.xlu0 %587
        %v589 = vsel %vm579, %v516, 0.0
        %590 = vadd.xlane.f32.xlu0 %v589
        %v591 = vpop.xlane.xlu0 %590
        %v592 = vsel %vm579, %v521, 0.0
        %593 = vadd.xlane.f32.xlu0 %v592
        %v594 = vpop.xlane.xlu0 %593
        %v595 = vsel %vm579, %v526, 0.0
        %596 = vadd.xlane.f32.xlu0 %v595
        %v597 = vpop.xlane.xlu0 %596
        %v598 = vsel %vm579, %v531, 0.0
        %599 = vadd.xlane.f32.xlu0 %v598
        %v600 = vpop.xlane.xlu0 %599
        %v601 = vsel %vm579, %v536, 0.0
        %602 = vadd.xlane.f32.xlu0 %v601
        %v603 = vpop.xlane.xlu0 %602
        %v604 = vsel %vm579, %v541, 0.0
        %605 = vadd.xlane.f32.xlu0 %v604
        %v606 = vpop.xlane.xlu0 %605
        %v607 = vsel %vm579, %v546, 0.0
        %608 = vadd.xlane.f32.xlu0 %v607
        %v609 = vpop.xlane.xlu0 %608
        %v610 = vsel %vm579, %v551, 0.0
        %611 = vadd.xlane.f32.xlu0 %v610
        %v612 = vpop.xlane.xlu0 %611
        %v613 = vsel %vm579, %v556, 0.0
        %614 = vadd.xlane.f32.xlu0 %v613
        %v615 = vpop.xlane.xlu0 %614
        %v616 = vsel %vm579, %v561, 0.0
        %617 = vadd.xlane.f32.xlu0 %v616
        %v618 = vpop.xlane.xlu0 %617
        %v619 = vsel %vm579, %v566, 0.0
        %620 = vadd.xlane.f32.xlu0 %v619
        %v621 = vpop.xlane.xlu0 %620
        %v622 = vsel %vm579, %v571, 0.0
        %623 = vadd.xlane.f32.xlu0 %v622
        %v624 = vpop.xlane.xlu0 %623
        %v625 = vsel %vm579, %v576, 0.0
        %626 = vadd.xlane.f32.xlu0 %v625
        %v627 = vpop.xlane.xlu0 %626
        %v628 = vadd.f32 %v582, %v585
        %v629 = vrot.slane %v628, 4
        %v630 = vadd.f32 %v628, %v629
        %v631 = vrot.slane %v630, 2
        %v632 = vadd.f32 %v630, %v631
        %v633 = vrot.slane %v632, 1
        %v634 = vadd.f32 %v632, %v633
        %v635 = vadd.f32 %v588, %v591
        %v636 = vrot.slane %v635, 4
        %v637 = vadd.f32 %v635, %v636
        %v638 = vrot.slane %v637, 2
        %v639 = vadd.f32 %v637, %v638
        %v640 = vrot.slane %v639, 1
        %v641 = vadd.f32 %v639, %v640
        %v642 = vadd.f32 %v594, %v597
        %v643 = vrot.slane %v642, 4
        %v644 = vadd.f32 %v642, %v643
        %v645 = vrot.slane %v644, 2
        %v646 = vadd.f32 %v644, %v645
        %v647 = vrot.slane %v646, 1
        %v648 = vadd.f32 %v646, %v647
        %v649 = vadd.f32 %v600, %v603
        %v650 = vrot.slane %v649, 4
        %v651 = vadd.f32 %v649, %v650
        %v652 = vrot.slane %v651, 2
        %v653 = vadd.f32 %v651, %v652
        %v654 = vrot.slane %v653, 1
        %v655 = vadd.f32 %v653, %v654
        %v656 = vadd.f32 %v606, %v609
        %v657 = vrot.slane %v656, 4
        %v658 = vadd.f32 %v656, %v657
        %v659 = vrot.slane %v658, 2
        %v660 = vadd.f32 %v658, %v659
        %v661 = vrot.slane %v660, 1
        %v662 = vadd.f32 %v660, %v661
        %v663 = vadd.f32 %v612, %v615
        %v664 = vrot.slane %v663, 4
        %v665 = vadd.f32 %v663, %v664
        %v666 = vrot.slane %v665, 2
        %v667 = vadd.f32 %v665, %v666
        %v668 = vrot.slane %v667, 1
        %v669 = vadd.f32 %v667, %v668
        %v670 = vadd.f32 %v618, %v621
        %v671 = vrot.slane %v670, 4
        %v672 = vadd.f32 %v670, %v671
        %v673 = vrot.slane %v672, 2
        %v674 = vadd.f32 %v672, %v673
        %v675 = vrot.slane %v674, 1
        %v676 = vadd.f32 %v674, %v675
        %v677 = vadd.f32 %v624, %v627
        %v678 = vrot.slane %v677, 4
        %v679 = vadd.f32 %v677, %v678
        %v680 = vrot.slane %v679, 2
        %v681 = vadd.f32 %v679, %v680
        %v682 = vrot.slane %v681, 1
        %v683 = vadd.f32 %v681, %v682
        %v684 = vmul.f32 %v501, %v501
        %v685 = vmul.f32 %v506, %v506
        %v686 = vmul.f32 %v511, %v511
        %v687 = vmul.f32 %v516, %v516
        %v688 = vmul.f32 %v521, %v521
        %v689 = vmul.f32 %v526, %v526
        %v690 = vmul.f32 %v531, %v531
        %v691 = vmul.f32 %v536, %v536
        %v692 = vmul.f32 %v541, %v541
        %v693 = vmul.f32 %v546, %v546
        %v694 = vmul.f32 %v551, %v551
        %v695 = vmul.f32 %v556, %v556
        %v696 = vmul.f32 %v561, %v561
        %v697 = vmul.f32 %v566, %v566
        %v698 = vmul.f32 %v571, %v571
        %v699 = vmul.f32 %v576, %v576
        %v700 = vsel %vm579, %v684, 0.0
        %701 = vadd.xlane.f32.xlu0 %v700
        %v702 = vpop.xlane.xlu0 %701
        %v703 = vsel %vm579, %v685, 0.0
        %704 = vadd.xlane.f32.xlu0 %v703
        %v705 = vpop.xlane.xlu0 %704
        %v706 = vsel %vm579, %v686, 0.0
        %707 = vadd.xlane.f32.xlu0 %v706
        %v708 = vpop.xlane.xlu0 %707
        %v709 = vsel %vm579, %v687, 0.0
        %710 = vadd.xlane.f32.xlu0 %v709
        %v711 = vpop.xlane.xlu0 %710
        %v712 = vsel %vm579, %v688, 0.0
        %713 = vadd.xlane.f32.xlu0 %v712
        %v714 = vpop.xlane.xlu0 %713
        %v715 = vsel %vm579, %v689, 0.0
        %716 = vadd.xlane.f32.xlu0 %v715
        %v717 = vpop.xlane.xlu0 %716
        %v718 = vsel %vm579, %v690, 0.0
        %719 = vadd.xlane.f32.xlu0 %v718
        %v720 = vpop.xlane.xlu0 %719
        %v721 = vsel %vm579, %v691, 0.0
        %722 = vadd.xlane.f32.xlu0 %v721
        %v723 = vpop.xlane.xlu0 %722
        %v724 = vsel %vm579, %v692, 0.0
        %725 = vadd.xlane.f32.xlu0 %v724
        %v726 = vpop.xlane.xlu0 %725
        %v727 = vsel %vm579, %v693, 0.0
        %728 = vadd.xlane.f32.xlu0 %v727
        %v729 = vpop.xlane.xlu0 %728
        %v730 = vsel %vm579, %v694, 0.0
        %731 = vadd.xlane.f32.xlu0 %v730
        %v732 = vpop.xlane.xlu0 %731
        %v733 = vsel %vm579, %v695, 0.0
        %734 = vadd.xlane.f32.xlu0 %v733
        %v735 = vpop.xlane.xlu0 %734
        %v736 = vsel %vm579, %v696, 0.0
        %737 = vadd.xlane.f32.xlu0 %v736
        %v738 = vpop.xlane.xlu0 %737
        %v739 = vsel %vm579, %v697, 0.0
        %740 = vadd.xlane.f32.xlu0 %v739
        %v741 = vpop.xlane.xlu0 %740
        %v742 = vsel %vm579, %v698, 0.0
        %743 = vadd.xlane.f32.xlu0 %v742
        %v744 = vpop.xlane.xlu0 %743
        %v745 = vsel %vm579, %v699, 0.0
        %746 = vadd.xlane.f32.xlu0 %v745
        %v747 = vpop.xlane.xlu0 %746
        %v748 = vadd.f32 %v702, %v705
        %v749 = vrot.slane %v748, 4
        %v750 = vadd.f32 %v748, %v749
        %v751 = vrot.slane %v750, 2
        %v752 = vadd.f32 %v750, %v751
        %v753 = vrot.slane %v752, 1
        %v754 = vadd.f32 %v752, %v753
        %v755 = vadd.f32 %v708, %v711
        %v756 = vrot.slane %v755, 4
        %v757 = vadd.f32 %v755, %v756
        %v758 = vrot.slane %v757, 2
        %v759 = vadd.f32 %v757, %v758
        %v760 = vrot.slane %v759, 1
        %v761 = vadd.f32 %v759, %v760
        %v762 = vadd.f32 %v714, %v717
        %v763 = vrot.slane %v762, 4
        %v764 = vadd.f32 %v762, %v763
        %v765 = vrot.slane %v764, 2
        %v766 = vadd.f32 %v764, %v765
        %v767 = vrot.slane %v766, 1
        %v768 = vadd.f32 %v766, %v767
        %v769 = vadd.f32 %v720, %v723
        %v770 = vrot.slane %v769, 4
        %v771 = vadd.f32 %v769, %v770
        %v772 = vrot.slane %v771, 2
        %v773 = vadd.f32 %v771, %v772
        %v774 = vrot.slane %v773, 1
        %v775 = vadd.f32 %v773, %v774
        %v776 = vadd.f32 %v726, %v729
        %v777 = vrot.slane %v776, 4
        %v778 = vadd.f32 %v776, %v777
        %v779 = vrot.slane %v778, 2
        %v780 = vadd.f32 %v778, %v779
        %v781 = vrot.slane %v780, 1
        %v782 = vadd.f32 %v780, %v781
        %v783 = vadd.f32 %v732, %v735
        %v784 = vrot.slane %v783, 4
        %v785 = vadd.f32 %v783, %v784
        %v786 = vrot.slane %v785, 2
        %v787 = vadd.f32 %v785, %v786
        %v788 = vrot.slane %v787, 1
        %v789 = vadd.f32 %v787, %v788
        %v790 = vadd.f32 %v738, %v741
        %v791 = vrot.slane %v790, 4
        %v792 = vadd.f32 %v790, %v791
        %v793 = vrot.slane %v792, 2
        %v794 = vadd.f32 %v792, %v793
        %v795 = vrot.slane %v794, 1
        %v796 = vadd.f32 %v794, %v795
        %v797 = vadd.f32 %v744, %v747
        %v798 = vrot.slane %v797, 4
        %v799 = vadd.f32 %v797, %v798
        %v800 = vrot.slane %v799, 2
        %v801 = vadd.f32 %v799, %v800
        %v802 = vrot.slane %v801, 1
        %v803 = vadd.f32 %v801, %v802
        %v804 = vmul.f32 %v634, 0.00390625
        %v805 = vmul.f32 %v641, 0.00390625
        %v806 = vmul.f32 %v648, 0.00390625
        %v807 = vmul.f32 %v655, 0.00390625
        %v808 = vmul.f32 %v662, 0.00390625
        %v809 = vmul.f32 %v669, 0.00390625
        %v810 = vmul.f32 %v676, 0.00390625
        %v811 = vmul.f32 %v683, 0.00390625
        %v812 = vmul.f32 %v634, %v804
        %v813 = vmul.f32 %v641, %v805
        %v814 = vmul.f32 %v648, %v806
        %v815 = vmul.f32 %v655, %v807
        %v816 = vmul.f32 %v662, %v808
        %v817 = vmul.f32 %v669, %v809
        %v818 = vmul.f32 %v676, %v810
        %v819 = vmul.f32 %v683, %v811
        %v820 = vsub.f32 %v754, %v812
        %v821 = vsub.f32 %v761, %v813
        %v822 = vsub.f32 %v768, %v814
        %v823 = vsub.f32 %v775, %v815
        %v824 = vsub.f32 %v782, %v816
        %v825 = vsub.f32 %v789, %v817
        %v826 = vsub.f32 %v796, %v818
        %v827 = vsub.f32 %v803, %v819
        %v828 = vmax.f32 %v820, 0.0
        %v829 = vmax.f32 %v821, 0.0
        %v830 = vmax.f32 %v822, 0.0
        %v831 = vmax.f32 %v823, 0.0
        %v832 = vmax.f32 %v824, 0.0
        %v833 = vmax.f32 %v825, 0.0
        %v834 = vmax.f32 %v826, 0.0
        %v835 = vmax.f32 %v827, 0.0
        %v836 = vmul.f32 %v828, 0.003921569
        %v837 = vmul.f32 %v829, 0.003921569
        %v838 = vmul.f32 %v830, 0.003921569
        %v839 = vmul.f32 %v831, 0.003921569
        %v840 = vmul.f32 %v832, 0.003921569
        %v841 = vmul.f32 %v833, 0.003921569
        %v842 = vmul.f32 %v834, 0.003921569
        %v843 = vmul.f32 %v835, 0.003921569
        %v844 = vrsqrt.pop %v836
        %v845 = vmul.f32 %v836, %v844
        %vm846 = vcmp.eq.f32.partialorder %v836, inf
        %v847 = vsel %vm846, %v836, %v845
        %vm848 = vcmp.eq.f32.partialorder %v836, 0.0
        %v849 = vand.u32 %v836, 2147483648
        %v850 = vsel %vm848, %v849, %v847
        %v851 = vrsqrt.pop %v837
        %v852 = vmul.f32 %v837, %v851
        %vm853 = vcmp.eq.f32.partialorder %v837, inf
        %v854 = vsel %vm853, %v837, %v852
        %vm855 = vcmp.eq.f32.partialorder %v837, 0.0
        %v856 = vand.u32 %v837, 2147483648
        %v857 = vsel %vm855, %v856, %v854
        %v858 = vrsqrt.pop %v838
        %v859 = vmul.f32 %v838, %v858
        %vm860 = vcmp.eq.f32.partialorder %v838, inf
        %v861 = vsel %vm860, %v838, %v859
        %vm862 = vcmp.eq.f32.partialorder %v838, 0.0
        %v863 = vand.u32 %v838, 2147483648
        %v864 = vsel %vm862, %v863, %v861
        %v865 = vrsqrt.pop %v839
        %v866 = vmul.f32 %v839, %v865
        %vm867 = vcmp.eq.f32.partialorder %v839, inf
        %v868 = vsel %vm867, %v839, %v866
        %vm869 = vcmp.eq.f32.partialorder %v839, 0.0
        %v870 = vand.u32 %v839, 2147483648
        %v871 = vsel %vm869, %v870, %v868
        %v872 = vrsqrt.pop %v840
        %v873 = vmul.f32 %v840, %v872
        %vm874 = vcmp.eq.f32.partialorder %v840, inf
        %v875 = vsel %vm874, %v840, %v873
        %vm876 = vcmp.eq.f32.partialorder %v840, 0.0
        %v877 = vand.u32 %v840, 2147483648
        %v878 = vsel %vm876, %v877, %v875
        %v879 = vrsqrt.pop %v841
        %v880 = vmul.f32 %v841, %v879
        %vm881 = vcmp.eq.f32.partialorder %v841, inf
        %v882 = vsel %vm881, %v841, %v880
        %vm883 = vcmp.eq.f32.partialorder %v841, 0.0
        %v884 = vand.u32 %v841, 2147483648
        %v885 = vsel %vm883, %v884, %v882
        %v886 = vrsqrt.pop %v842
        %v887 = vmul.f32 %v842, %v886
        %vm888 = vcmp.eq.f32.partialorder %v842, inf
        %v889 = vsel %vm888, %v842, %v887
        %vm890 = vcmp.eq.f32.partialorder %v842, 0.0
        %v891 = vand.u32 %v842, 2147483648
        %v892 = vsel %vm890, %v891, %v889
        %v893 = vrsqrt.pop %v843
        %v894 = vmul.f32 %v843, %v893
        %vm895 = vcmp.eq.f32.partialorder %v843, inf
        %v896 = vsel %vm895, %v843, %v894
        %vm897 = vcmp.eq.f32.partialorder %v843, 0.0
        %v898 = vand.u32 %v843, 2147483648
        %v899 = vsel %vm897, %v898, %v896
        %v900 = vadd.f32 %v850, 0.001
        %v901 = vadd.f32 %v857, 0.001
        %v902 = vadd.f32 %v864, 0.001
        %v903 = vadd.f32 %v871, 0.001
        %v904 = vadd.f32 %v878, 0.001
        %v905 = vadd.f32 %v885, 0.001
        %v906 = vadd.f32 %v892, 0.001
        %v907 = vadd.f32 %v899, 0.001
        %v908 = vrcp.pop %v900
        %v909 = vmul.f32 1.0, %v908
        %v910 = vrcp.pop %v901
        %v911 = vmul.f32 1.0, %v910
        %v912 = vrcp.pop %v902
        %v913 = vmul.f32 1.0, %v912
        %v914 = vrcp.pop %v903
        %v915 = vmul.f32 1.0, %v914
        %v916 = vrcp.pop %v904
        %v917 = vmul.f32 1.0, %v916
        %v918 = vrcp.pop %v905
        %v919 = vmul.f32 1.0, %v918
        %v920 = vrcp.pop %v906
        %v921 = vmul.f32 1.0, %v920
        %v922 = vrcp.pop %v907
        %v923 = vmul.f32 1.0, %v922
        %v924 = vsub.f32 %v501, %v804
        %v925 = vsub.f32 %v506, %v804
        %v926 = vsub.f32 %v511, %v805
        %v927 = vsub.f32 %v516, %v805
        %v928 = vsub.f32 %v521, %v806
        %v929 = vsub.f32 %v526, %v806
        %v930 = vsub.f32 %v531, %v807
        %v931 = vsub.f32 %v536, %v807
        %v932 = vsub.f32 %v541, %v808
        %v933 = vsub.f32 %v546, %v808
        %v934 = vsub.f32 %v551, %v809
        %v935 = vsub.f32 %v556, %v809
        %v936 = vsub.f32 %v561, %v810
        %v937 = vsub.f32 %v566, %v810
        %v938 = vsub.f32 %v571, %v811
        %v939 = vsub.f32 %v576, %v811
        %v940 = vmul.f32 %v924, %v909
        %v941 = vmul.f32 %v925, %v909
        %v942 = vmul.f32 %v926, %v911
        %v943 = vmul.f32 %v927, %v911
        %v944 = vmul.f32 %v928, %v913
        %v945 = vmul.f32 %v929, %v913
        %v946 = vmul.f32 %v930, %v915
        %v947 = vmul.f32 %v931, %v915
        %v948 = vmul.f32 %v932, %v917
        %v949 = vmul.f32 %v933, %v917
        %v950 = vmul.f32 %v934, %v919
        %v951 = vmul.f32 %v935, %v919
        %v952 = vmul.f32 %v936, %v921
        %v953 = vmul.f32 %v937, %v921
        %v954 = vmul.f32 %v938, %v923
        %v955 = vmul.f32 %v939, %v923
        %v956 = vmax.f32 %v940, 0.0
        %v957 = vmax.f32 %v941, 0.0
        %v958 = vmax.f32 %v942, 0.0
        %v959 = vmax.f32 %v943, 0.0
        %v960 = vmax.f32 %v944, 0.0
        %v961 = vmax.f32 %v945, 0.0
        %v962 = vmax.f32 %v946, 0.0
        %v963 = vmax.f32 %v947, 0.0
        %v964 = vmax.f32 %v948, 0.0
        %v965 = vmax.f32 %v949, 0.0
        %v966 = vmax.f32 %v950, 0.0
        %v967 = vmax.f32 %v951, 0.0
        %v968 = vmax.f32 %v952, 0.0
        %v969 = vmax.f32 %v953, 0.0
        %v970 = vmax.f32 %v954, 0.0
        %v971 = vmax.f32 %v955, 0.0
        %v972 = vld [vmem:[%s2] sm:$0xff]
        %v973 = vld [vmem:[%s2 + $0x8] sm:$0xff]
        %v974 = vlaneseq
        %v975 = vshrl.u32 %v974, 7
        %v976 = vsub.s32 0, %v975
        %v977 = vrot.slane %v372, %v976
        %v979 = vsel %vm579, %v956, 0
        %v982 = vsel %vm579, %v957, 0
        %v985 = vsel %vm579, %v958, 0
        %v988 = vsel %vm579, %v959, 0
        %v991 = vsel %vm579, %v960, 0
        %v994 = vsel %vm579, %v961, 0
        %v997 = vsel %vm579, %v962, 0
        %v1000 = vsel %vm579, %v963, 0
        %v1003 = vsel %vm579, %v964, 0
        %v1006 = vsel %vm579, %v965, 0
        %v1009 = vsel %vm579, %v966, 0
        %v1012 = vsel %vm579, %v967, 0
        %v1015 = vsel %vm579, %v968, 0
        %v1018 = vsel %vm579, %v969, 0
        %v1021 = vsel %vm579, %v970, 0
        %v1024 = vsel %vm579, %v971, 0
        %1026 = vmatprep.subr.mxu0 0.0
        %1027 = vmatpush1.msra.mxu0 0.0
        %1028 = vmatprep.subr.mxu0 0.0
        %1029 = vmatpush1.msra.mxu0 0.0
        %1030 = vmatprep.subr.mxu0 0.0
        %1031 = vmatpush1.msra.mxu0 0.0
        %1032 = vmatprep.subr.mxu0 0.0
        %1033 = vmatpush1.msra.mxu0 0.0
        %1034 = vmatprep.subr.mxu0 0.0
        %1035 = vmatpush1.msra.mxu0 0.0
        %1036 = vmatprep.subr.mxu0 0.0
        %1037 = vmatpush1.msra.mxu0 0.0
        %1038 = vmatprep.subr.mxu0 0.0
        %1039 = vmatpush1.msra.mxu0 0.0
        %1040 = vmatprep.subr.mxu0 0.0
        %1041 = vmatpush1.msra.mxu0 0.0
        %1042 = vmatprep.subr.mxu0 0.0
        %1043 = vmatpush1.msra.mxu0 0.0
        %1044 = vmatprep.subr.mxu0 0.0
        %1045 = vmatpush1.msra.mxu0 0.0
        %1046 = vmatprep.subr.mxu0 0.0
        %1047 = vmatpush1.msra.mxu0 0.0
        %1048 = vmatprep.subr.mxu0 0.0
        %1049 = vmatpush1.msra.mxu0 0.0
        %1050 = vmatprep.subr.mxu0 0.0
        %1051 = vmatpush1.msra.mxu0 0.0
        %1052 = vmatprep.subr.mxu0 0.0
        %1053 = vmatpush1.msra.mxu0 0.0
        %1054 = vmatprep.subr.mxu0 0.0
        %1055 = vmatpush1.msra.mxu0 %v973
        %1056 = vmatprep.subr.mxu0 0.0
        %1057 = vmatpush1.msra.mxu0 %v972
        %1058 = vmatprep.subr.mxu0 0.0
        %1059 = vmatpush2.msra.mxu0 0.0
        %1060 = vmatprep.subr.mxu0 0.0
        %1061 = vmatpush2.msra.mxu0 0.0
        %1062 = vmatprep.subr.mxu0 0.0
        %1063 = vmatpush2.msra.mxu0 0.0
        %1064 = vmatprep.subr.mxu0 0.0
        %1065 = vmatpush2.msra.mxu0 0.0
        %1066 = vmatprep.subr.mxu0 0.0
        %1067 = vmatpush2.msra.mxu0 0.0
        %1068 = vmatprep.subr.mxu0 0.0
        %1069 = vmatpush2.msra.mxu0 0.0
        %1070 = vmatprep.subr.mxu0 0.0
        %1071 = vmatpush2.msra.mxu0 0.0
        %1072 = vmatprep.subr.mxu0 0.0
        %1073 = vmatpush2.msra.mxu0 0.0
        %1074 = vmatprep.subr.mxu0 0.0
        %1075 = vmatpush2.msra.mxu0 0.0
        %1076 = vmatprep.subr.mxu0 0.0
        %1077 = vmatpush2.msra.mxu0 0.0
        %1078 = vmatprep.subr.mxu0 0.0
        %1079 = vmatpush2.msra.mxu0 0.0
        %1080 = vmatprep.subr.mxu0 0.0
        %1081 = vmatpush2.msra.mxu0 0.0
        %1082 = vmatprep.subr.mxu0 0.0
        %1083 = vmatpush2.msra.mxu0 0.0
        %1084 = vmatprep.subr.mxu0 0.0
        %1085 = vmatpush2.msra.mxu0 0.0
        %1086 = vmatprep.subr.mxu0 0.0
        %1087 = vmatpush2.msra.mxu0 0.0
        %1088 = vmatprep.subr.mxu0 0.0
        %1089 = vmatpush2.msra.mxu0 0.0
        %1090 = vmatprep.mubr.f32.mxu0 0.0
        %1091 = vmatmul.mubr.f32.gmra.mxu0 %v979
        %v1092 = vpop.f32.mrf.mxu0
        %v1093 = vadd.f32 %v977, %v1092
        %v1094 = vpop.f32.mrf.mxu0
        %1095 = vmatprep.mubr.f32.mxu0 0.0
        %1096 = vmatmul.mubr.f32.gmra.mxu0 %v982
        %v1097 = vpop.f32.mrf.mxu0
        %v1098 = vadd.f32 %v977, %v1097
        %v1099 = vpop.f32.mrf.mxu0
        %1100 = vmatprep.mubr.f32.mxu0 0.0
        %1101 = vmatmul.mubr.f32.gmra.mxu0 %v985
        %v1102 = vpop.f32.mrf.mxu0
        %v1103 = vadd.f32 %v977, %v1102
        %v1104 = vpop.f32.mrf.mxu0
        %1105 = vmatprep.mubr.f32.mxu0 0.0
        %1106 = vmatmul.mubr.f32.gmra.mxu0 %v988
        %v1107 = vpop.f32.mrf.mxu0
        %v1108 = vadd.f32 %v977, %v1107
        %v1109 = vpop.f32.mrf.mxu0
        %1110 = vmatprep.mubr.f32.mxu0 0.0
        %1111 = vmatmul.mubr.f32.gmra.mxu0 %v991
        %v1112 = vpop.f32.mrf.mxu0
        %v1113 = vadd.f32 %v977, %v1112
        %v1114 = vpop.f32.mrf.mxu0
        %1115 = vmatprep.mubr.f32.mxu0 0.0
        %1116 = vmatmul.mubr.f32.gmra.mxu0 %v994
        %v1117 = vpop.f32.mrf.mxu0
        %v1118 = vadd.f32 %v977, %v1117
        %v1119 = vpop.f32.mrf.mxu0
        %1120 = vmatprep.mubr.f32.mxu0 0.0
        %1121 = vmatmul.mubr.f32.gmra.mxu0 %v997
        %v1122 = vpop.f32.mrf.mxu0
        %v1123 = vadd.f32 %v977, %v1122
        %v1124 = vpop.f32.mrf.mxu0
        %1125 = vmatprep.mubr.f32.mxu0 0.0
        %1126 = vmatmul.mubr.f32.gmra.mxu0 %v1000
        %v1127 = vpop.f32.mrf.mxu0
        %v1128 = vadd.f32 %v977, %v1127
        %v1129 = vpop.f32.mrf.mxu0
        %1130 = vmatprep.mubr.f32.mxu0 0.0
        %1131 = vmatmul.mubr.f32.gmra.mxu0 %v1003
        %v1132 = vpop.f32.mrf.mxu0
        %v1133 = vadd.f32 %v977, %v1132
        %v1134 = vpop.f32.mrf.mxu0
        %1135 = vmatprep.mubr.f32.mxu0 0.0
        %1136 = vmatmul.mubr.f32.gmra.mxu0 %v1006
        %v1137 = vpop.f32.mrf.mxu0
        %v1138 = vadd.f32 %v977, %v1137
        %v1139 = vpop.f32.mrf.mxu0
        %1140 = vmatprep.mubr.f32.mxu0 0.0
        %1141 = vmatmul.mubr.f32.gmra.mxu0 %v1009
        %v1142 = vpop.f32.mrf.mxu0
        %v1143 = vadd.f32 %v977, %v1142
        %v1144 = vpop.f32.mrf.mxu0
        %1145 = vmatprep.mubr.f32.mxu0 0.0
        %1146 = vmatmul.mubr.f32.gmra.mxu0 %v1012
        %v1147 = vpop.f32.mrf.mxu0
        %v1148 = vadd.f32 %v977, %v1147
        %v1149 = vpop.f32.mrf.mxu0
        %1150 = vmatprep.mubr.f32.mxu0 0.0
        %1151 = vmatmul.mubr.f32.gmra.mxu0 %v1015
        %v1152 = vpop.f32.mrf.mxu0
        %v1153 = vadd.f32 %v977, %v1152
        %v1154 = vpop.f32.mrf.mxu0
        %1155 = vmatprep.mubr.f32.mxu0 0.0
        %1156 = vmatmul.mubr.f32.gmra.mxu0 %v1018
        %v1157 = vpop.f32.mrf.mxu0
        %v1158 = vadd.f32 %v977, %v1157
        %v1159 = vpop.f32.mrf.mxu0
        %1160 = vmatprep.mubr.f32.mxu0 0.0
        %1161 = vmatmul.mubr.f32.gmra.mxu0 %v1021
        %v1162 = vpop.f32.mrf.mxu0
        %v1163 = vadd.f32 %v977, %v1162
        %v1164 = vpop.f32.mrf.mxu0
        %1165 = vmatprep.mubr.f32.mxu0 0.0
        %1166 = vmatmul.mubr.f32.gmra.mxu0 %v1024
        %v1167 = vpop.f32.mrf.mxu0
        %v1168 = vadd.f32 %v977, %v1167
        %v1169 = vpop.f32.mrf.mxu0
        %1170 = vdwg.mxu0
        %vm1171 = vcmask 64512
        %v1172 = vsel %vm1171, %v1093, 0.0
        %1173 = vadd.xlane.f32.xlu0 %v1172
        %v1174 = vpop.xlane.xlu0 %1173
        %v1175 = vsel %vm1171, %v1098, 0.0
        %1176 = vadd.xlane.f32.xlu0 %v1175
        %v1177 = vpop.xlane.xlu0 %1176
        %v1178 = vsel %vm1171, %v1103, 0.0
        %1179 = vadd.xlane.f32.xlu0 %v1178
        %v1180 = vpop.xlane.xlu0 %1179
        %v1181 = vsel %vm1171, %v1108, 0.0
        %1182 = vadd.xlane.f32.xlu0 %v1181
        %v1183 = vpop.xlane.xlu0 %1182
        %v1184 = vsel %vm1171, %v1113, 0.0
        %1185 = vadd.xlane.f32.xlu0 %v1184
        %v1186 = vpop.xlane.xlu0 %1185
        %v1187 = vsel %vm1171, %v1118, 0.0
        %1188 = vadd.xlane.f32.xlu0 %v1187
        %v1189 = vpop.xlane.xlu0 %1188
        %v1190 = vsel %vm1171, %v1123, 0.0
        %1191 = vadd.xlane.f32.xlu0 %v1190
        %v1192 = vpop.xlane.xlu0 %1191
        %v1193 = vsel %vm1171, %v1128, 0.0
        %1194 = vadd.xlane.f32.xlu0 %v1193
        %v1195 = vpop.xlane.xlu0 %1194
        %v1196 = vsel %vm1171, %v1133, 0.0
        %1197 = vadd.xlane.f32.xlu0 %v1196
        %v1198 = vpop.xlane.xlu0 %1197
        %v1199 = vsel %vm1171, %v1138, 0.0
        %1200 = vadd.xlane.f32.xlu0 %v1199
        %v1201 = vpop.xlane.xlu0 %1200
        %v1202 = vsel %vm1171, %v1143, 0.0
        %1203 = vadd.xlane.f32.xlu0 %v1202
        %v1204 = vpop.xlane.xlu0 %1203
        %v1205 = vsel %vm1171, %v1148, 0.0
        %1206 = vadd.xlane.f32.xlu0 %v1205
        %v1207 = vpop.xlane.xlu0 %1206
        %v1208 = vsel %vm1171, %v1153, 0.0
        %1209 = vadd.xlane.f32.xlu0 %v1208
        %v1210 = vpop.xlane.xlu0 %1209
        %v1211 = vsel %vm1171, %v1158, 0.0
        %1212 = vadd.xlane.f32.xlu0 %v1211
        %v1213 = vpop.xlane.xlu0 %1212
        %v1214 = vsel %vm1171, %v1163, 0.0
        %1215 = vadd.xlane.f32.xlu0 %v1214
        %v1216 = vpop.xlane.xlu0 %1215
        %v1217 = vsel %vm1171, %v1168, 0.0
        %1218 = vadd.xlane.f32.xlu0 %v1217
        %v1219 = vpop.xlane.xlu0 %1218
        %v1220 = vadd.f32 %v1174, %v1177
        %v1221 = vrot.slane %v1220, 4
        %v1222 = vadd.f32 %v1220, %v1221
        %v1223 = vrot.slane %v1222, 2
        %v1224 = vadd.f32 %v1222, %v1223
        %v1225 = vrot.slane %v1224, 1
        %v1226 = vadd.f32 %v1224, %v1225
        %v1227 = vadd.f32 %v1180, %v1183
        %v1228 = vrot.slane %v1227, 4
        %v1229 = vadd.f32 %v1227, %v1228
        %v1230 = vrot.slane %v1229, 2
        %v1231 = vadd.f32 %v1229, %v1230
        %v1232 = vrot.slane %v1231, 1
        %v1233 = vadd.f32 %v1231, %v1232
        %v1234 = vadd.f32 %v1186, %v1189
        %v1235 = vrot.slane %v1234, 4
        %v1236 = vadd.f32 %v1234, %v1235
        %v1237 = vrot.slane %v1236, 2
        %v1238 = vadd.f32 %v1236, %v1237
        %v1239 = vrot.slane %v1238, 1
        %v1240 = vadd.f32 %v1238, %v1239
        %v1241 = vadd.f32 %v1192, %v1195
        %v1242 = vrot.slane %v1241, 4
        %v1243 = vadd.f32 %v1241, %v1242
        %v1244 = vrot.slane %v1243, 2
        %v1245 = vadd.f32 %v1243, %v1244
        %v1246 = vrot.slane %v1245, 1
        %v1247 = vadd.f32 %v1245, %v1246
        %v1248 = vadd.f32 %v1198, %v1201
        %v1249 = vrot.slane %v1248, 4
        %v1250 = vadd.f32 %v1248, %v1249
        %v1251 = vrot.slane %v1250, 2
        %v1252 = vadd.f32 %v1250, %v1251
        %v1253 = vrot.slane %v1252, 1
        %v1254 = vadd.f32 %v1252, %v1253
        %v1255 = vadd.f32 %v1204, %v1207
        %v1256 = vrot.slane %v1255, 4
        %v1257 = vadd.f32 %v1255, %v1256
        %v1258 = vrot.slane %v1257, 2
        %v1259 = vadd.f32 %v1257, %v1258
        %v1260 = vrot.slane %v1259, 1
        %v1261 = vadd.f32 %v1259, %v1260
        %v1262 = vadd.f32 %v1210, %v1213
        %v1263 = vrot.slane %v1262, 4
        %v1264 = vadd.f32 %v1262, %v1263
        %v1265 = vrot.slane %v1264, 2
        %v1266 = vadd.f32 %v1264, %v1265
        %v1267 = vrot.slane %v1266, 1
        %v1268 = vadd.f32 %v1266, %v1267
        %v1269 = vadd.f32 %v1216, %v1219
        %v1270 = vrot.slane %v1269, 4
        %v1271 = vadd.f32 %v1269, %v1270
        %v1272 = vrot.slane %v1271, 2
        %v1273 = vadd.f32 %v1271, %v1272
        %v1274 = vrot.slane %v1273, 1
        %v1275 = vadd.f32 %v1273, %v1274
        %v1276 = vmul.f32 %v1093, %v1093
        %v1277 = vmul.f32 %v1098, %v1098
        %v1278 = vmul.f32 %v1103, %v1103
        %v1279 = vmul.f32 %v1108, %v1108
        %v1280 = vmul.f32 %v1113, %v1113
        %v1281 = vmul.f32 %v1118, %v1118
        %v1282 = vmul.f32 %v1123, %v1123
        %v1283 = vmul.f32 %v1128, %v1128
        %v1284 = vmul.f32 %v1133, %v1133
        %v1285 = vmul.f32 %v1138, %v1138
        %v1286 = vmul.f32 %v1143, %v1143
        %v1287 = vmul.f32 %v1148, %v1148
        %v1288 = vmul.f32 %v1153, %v1153
        %v1289 = vmul.f32 %v1158, %v1158
        %v1290 = vmul.f32 %v1163, %v1163
        %v1291 = vmul.f32 %v1168, %v1168
        %v1292 = vsel %vm1171, %v1276, 0.0
        %1293 = vadd.xlane.f32.xlu0 %v1292
        %v1294 = vpop.xlane.xlu0 %1293
        %v1295 = vsel %vm1171, %v1277, 0.0
        %1296 = vadd.xlane.f32.xlu0 %v1295
        %v1297 = vpop.xlane.xlu0 %1296
        %v1298 = vsel %vm1171, %v1278, 0.0
        %1299 = vadd.xlane.f32.xlu0 %v1298
        %v1300 = vpop.xlane.xlu0 %1299
        %v1301 = vsel %vm1171, %v1279, 0.0
        %1302 = vadd.xlane.f32.xlu0 %v1301
        %v1303 = vpop.xlane.xlu0 %1302
        %v1304 = vsel %vm1171, %v1280, 0.0
        %1305 = vadd.xlane.f32.xlu0 %v1304
        %v1306 = vpop.xlane.xlu0 %1305
        %v1307 = vsel %vm1171, %v1281, 0.0
        %1308 = vadd.xlane.f32.xlu0 %v1307
        %v1309 = vpop.xlane.xlu0 %1308
        %v1310 = vsel %vm1171, %v1282, 0.0
        %1311 = vadd.xlane.f32.xlu0 %v1310
        %v1312 = vpop.xlane.xlu0 %1311
        %v1313 = vsel %vm1171, %v1283, 0.0
        %1314 = vadd.xlane.f32.xlu0 %v1313
        %v1315 = vpop.xlane.xlu0 %1314
        %v1316 = vsel %vm1171, %v1284, 0.0
        %1317 = vadd.xlane.f32.xlu0 %v1316
        %v1318 = vpop.xlane.xlu0 %1317
        %v1319 = vsel %vm1171, %v1285, 0.0
        %1320 = vadd.xlane.f32.xlu0 %v1319
        %v1321 = vpop.xlane.xlu0 %1320
        %v1322 = vsel %vm1171, %v1286, 0.0
        %1323 = vadd.xlane.f32.xlu0 %v1322
        %v1324 = vpop.xlane.xlu0 %1323
        %v1325 = vsel %vm1171, %v1287, 0.0
        %1326 = vadd.xlane.f32.xlu0 %v1325
        %v1327 = vpop.xlane.xlu0 %1326
        %v1328 = vsel %vm1171, %v1288, 0.0
        %1329 = vadd.xlane.f32.xlu0 %v1328
        %v1330 = vpop.xlane.xlu0 %1329
        %v1331 = vsel %vm1171, %v1289, 0.0
        %1332 = vadd.xlane.f32.xlu0 %v1331
        %v1333 = vpop.xlane.xlu0 %1332
        %v1334 = vsel %vm1171, %v1290, 0.0
        %1335 = vadd.xlane.f32.xlu0 %v1334
        %v1336 = vpop.xlane.xlu0 %1335
        %v1337 = vsel %vm1171, %v1291, 0.0
        %1338 = vadd.xlane.f32.xlu0 %v1337
        %v1339 = vpop.xlane.xlu0 %1338
        %v1340 = vadd.f32 %v1294, %v1297
        %v1341 = vrot.slane %v1340, 4
        %v1342 = vadd.f32 %v1340, %v1341
        %v1343 = vrot.slane %v1342, 2
        %v1344 = vadd.f32 %v1342, %v1343
        %v1345 = vrot.slane %v1344, 1
        %v1346 = vadd.f32 %v1344, %v1345
        %v1347 = vadd.f32 %v1300, %v1303
        %v1348 = vrot.slane %v1347, 4
        %v1349 = vadd.f32 %v1347, %v1348
        %v1350 = vrot.slane %v1349, 2
        %v1351 = vadd.f32 %v1349, %v1350
        %v1352 = vrot.slane %v1351, 1
        %v1353 = vadd.f32 %v1351, %v1352
        %v1354 = vadd.f32 %v1306, %v1309
        %v1355 = vrot.slane %v1354, 4
        %v1356 = vadd.f32 %v1354, %v1355
        %v1357 = vrot.slane %v1356, 2
        %v1358 = vadd.f32 %v1356, %v1357
        %v1359 = vrot.slane %v1358, 1
        %v1360 = vadd.f32 %v1358, %v1359
        %v1361 = vadd.f32 %v1312, %v1315
        %v1362 = vrot.slane %v1361, 4
        %v1363 = vadd.f32 %v1361, %v1362
        %v1364 = vrot.slane %v1363, 2
        %v1365 = vadd.f32 %v1363, %v1364
        %v1366 = vrot.slane %v1365, 1
        %v1367 = vadd.f32 %v1365, %v1366
        %v1368 = vadd.f32 %v1318, %v1321
        %v1369 = vrot.slane %v1368, 4
        %v1370 = vadd.f32 %v1368, %v1369
        %v1371 = vrot.slane %v1370, 2
        %v1372 = vadd.f32 %v1370, %v1371
        %v1373 = vrot.slane %v1372, 1
        %v1374 = vadd.f32 %v1372, %v1373
        %v1375 = vadd.f32 %v1324, %v1327
        %v1376 = vrot.slane %v1375, 4
        %v1377 = vadd.f32 %v1375, %v1376
        %v1378 = vrot.slane %v1377, 2
        %v1379 = vadd.f32 %v1377, %v1378
        %v1380 = vrot.slane %v1379, 1
        %v1381 = vadd.f32 %v1379, %v1380
        %v1382 = vadd.f32 %v1330, %v1333
        %v1383 = vrot.slane %v1382, 4
        %v1384 = vadd.f32 %v1382, %v1383
        %v1385 = vrot.slane %v1384, 2
        %v1386 = vadd.f32 %v1384, %v1385
        %v1387 = vrot.slane %v1386, 1
        %v1388 = vadd.f32 %v1386, %v1387
        %v1389 = vadd.f32 %v1336, %v1339
        %v1390 = vrot.slane %v1389, 4
        %v1391 = vadd.f32 %v1389, %v1390
        %v1392 = vrot.slane %v1391, 2
        %v1393 = vadd.f32 %v1391, %v1392
        %v1394 = vrot.slane %v1393, 1
        %v1395 = vadd.f32 %v1393, %v1394
        %v1396 = vmul.f32 %v1226, 0.0078125
        %v1397 = vmul.f32 %v1233, 0.0078125
        %v1398 = vmul.f32 %v1240, 0.0078125
        %v1399 = vmul.f32 %v1247, 0.0078125
        %v1400 = vmul.f32 %v1254, 0.0078125
        %v1401 = vmul.f32 %v1261, 0.0078125
        %v1402 = vmul.f32 %v1268, 0.0078125
        %v1403 = vmul.f32 %v1275, 0.0078125
        %v1404 = vmul.f32 %v1226, %v1396
        %v1405 = vmul.f32 %v1233, %v1397
        %v1406 = vmul.f32 %v1240, %v1398
        %v1407 = vmul.f32 %v1247, %v1399
        %v1408 = vmul.f32 %v1254, %v1400
        %v1409 = vmul.f32 %v1261, %v1401
        %v1410 = vmul.f32 %v1268, %v1402
        %v1411 = vmul.f32 %v1275, %v1403
        %v1412 = vsub.f32 %v1346, %v1404
        %v1413 = vsub.f32 %v1353, %v1405
        %v1414 = vsub.f32 %v1360, %v1406
        %v1415 = vsub.f32 %v1367, %v1407
        %v1416 = vsub.f32 %v1374, %v1408
        %v1417 = vsub.f32 %v1381, %v1409
        %v1418 = vsub.f32 %v1388, %v1410
        %v1419 = vsub.f32 %v1395, %v1411
        %v1420 = vmax.f32 %v1412, 0.0
        %v1421 = vmax.f32 %v1413, 0.0
        %v1422 = vmax.f32 %v1414, 0.0
        %v1423 = vmax.f32 %v1415, 0.0
        %v1424 = vmax.f32 %v1416, 0.0
        %v1425 = vmax.f32 %v1417, 0.0
        %v1426 = vmax.f32 %v1418, 0.0
        %v1427 = vmax.f32 %v1419, 0.0
        %v1428 = vmul.f32 %v1420, 0.007874016
        %v1429 = vmul.f32 %v1421, 0.007874016
        %v1430 = vmul.f32 %v1422, 0.007874016
        %v1431 = vmul.f32 %v1423, 0.007874016
        %v1432 = vmul.f32 %v1424, 0.007874016
        %v1433 = vmul.f32 %v1425, 0.007874016
        %v1434 = vmul.f32 %v1426, 0.007874016
        %v1435 = vmul.f32 %v1427, 0.007874016
        %v1436 = vrsqrt.pop %v1428
        %v1437 = vmul.f32 %v1428, %v1436
        %vm1438 = vcmp.eq.f32.partialorder %v1428, inf
        %v1439 = vsel %vm1438, %v1428, %v1437
        %vm1440 = vcmp.eq.f32.partialorder %v1428, 0.0
        %v1441 = vand.u32 %v1428, 2147483648
        %v1442 = vsel %vm1440, %v1441, %v1439
        %v1443 = vrsqrt.pop %v1429
        %v1444 = vmul.f32 %v1429, %v1443
        %vm1445 = vcmp.eq.f32.partialorder %v1429, inf
        %v1446 = vsel %vm1445, %v1429, %v1444
        %vm1447 = vcmp.eq.f32.partialorder %v1429, 0.0
        %v1448 = vand.u32 %v1429, 2147483648
        %v1449 = vsel %vm1447, %v1448, %v1446
        %v1450 = vrsqrt.pop %v1430
        %v1451 = vmul.f32 %v1430, %v1450
        %vm1452 = vcmp.eq.f32.partialorder %v1430, inf
        %v1453 = vsel %vm1452, %v1430, %v1451
        %vm1454 = vcmp.eq.f32.partialorder %v1430, 0.0
        %v1455 = vand.u32 %v1430, 2147483648
        %v1456 = vsel %vm1454, %v1455, %v1453
        %v1457 = vrsqrt.pop %v1431
        %v1458 = vmul.f32 %v1431, %v1457
        %vm1459 = vcmp.eq.f32.partialorder %v1431, inf
        %v1460 = vsel %vm1459, %v1431, %v1458
        %vm1461 = vcmp.eq.f32.partialorder %v1431, 0.0
        %v1462 = vand.u32 %v1431, 2147483648
        %v1463 = vsel %vm1461, %v1462, %v1460
        %v1464 = vrsqrt.pop %v1432
        %v1465 = vmul.f32 %v1432, %v1464
        %vm1466 = vcmp.eq.f32.partialorder %v1432, inf
        %v1467 = vsel %vm1466, %v1432, %v1465
        %vm1468 = vcmp.eq.f32.partialorder %v1432, 0.0
        %v1469 = vand.u32 %v1432, 2147483648
        %v1470 = vsel %vm1468, %v1469, %v1467
        %v1471 = vrsqrt.pop %v1433
        %v1472 = vmul.f32 %v1433, %v1471
        %vm1473 = vcmp.eq.f32.partialorder %v1433, inf
        %v1474 = vsel %vm1473, %v1433, %v1472
        %vm1475 = vcmp.eq.f32.partialorder %v1433, 0.0
        %v1476 = vand.u32 %v1433, 2147483648
        %v1477 = vsel %vm1475, %v1476, %v1474
        %v1478 = vrsqrt.pop %v1434
        %v1479 = vmul.f32 %v1434, %v1478
        %vm1480 = vcmp.eq.f32.partialorder %v1434, inf
        %v1481 = vsel %vm1480, %v1434, %v1479
        %vm1482 = vcmp.eq.f32.partialorder %v1434, 0.0
        %v1483 = vand.u32 %v1434, 2147483648
        %v1484 = vsel %vm1482, %v1483, %v1481
        %v1485 = vrsqrt.pop %v1435
        %v1486 = vmul.f32 %v1435, %v1485
        %vm1487 = vcmp.eq.f32.partialorder %v1435, inf
        %v1488 = vsel %vm1487, %v1435, %v1486
        %vm1489 = vcmp.eq.f32.partialorder %v1435, 0.0
        %v1490 = vand.u32 %v1435, 2147483648
        %v1491 = vsel %vm1489, %v1490, %v1488
        %v1492 = vadd.f32 %v1442, 0.001
        %v1493 = vadd.f32 %v1449, 0.001
        %v1494 = vadd.f32 %v1456, 0.001
        %v1495 = vadd.f32 %v1463, 0.001
        %v1496 = vadd.f32 %v1470, 0.001
        %v1497 = vadd.f32 %v1477, 0.001
        %v1498 = vadd.f32 %v1484, 0.001
        %v1499 = vadd.f32 %v1491, 0.001
        %v1500 = vrcp.pop %v1492
        %v1501 = vmul.f32 1.0, %v1500
        %v1502 = vrcp.pop %v1493
        %v1503 = vmul.f32 1.0, %v1502
        %v1504 = vrcp.pop %v1494
        %v1505 = vmul.f32 1.0, %v1504
        %v1506 = vrcp.pop %v1495
        %v1507 = vmul.f32 1.0, %v1506
        %v1508 = vrcp.pop %v1496
        %v1509 = vmul.f32 1.0, %v1508
        %v1510 = vrcp.pop %v1497
        %v1511 = vmul.f32 1.0, %v1510
        %v1512 = vrcp.pop %v1498
        %v1513 = vmul.f32 1.0, %v1512
        %v1514 = vrcp.pop %v1499
        %v1515 = vmul.f32 1.0, %v1514
        %v1516 = vsub.f32 %v1093, %v1396
        %v1517 = vsub.f32 %v1098, %v1396
        %v1518 = vsub.f32 %v1103, %v1397
        %v1519 = vsub.f32 %v1108, %v1397
        %v1520 = vsub.f32 %v1113, %v1398
        %v1521 = vsub.f32 %v1118, %v1398
        %v1522 = vsub.f32 %v1123, %v1399
        %v1523 = vsub.f32 %v1128, %v1399
        %v1524 = vsub.f32 %v1133, %v1400
        %v1525 = vsub.f32 %v1138, %v1400
        %v1526 = vsub.f32 %v1143, %v1401
        %v1527 = vsub.f32 %v1148, %v1401
        %v1528 = vsub.f32 %v1153, %v1402
        %v1529 = vsub.f32 %v1158, %v1402
        %v1530 = vsub.f32 %v1163, %v1403
        %v1531 = vsub.f32 %v1168, %v1403
        %v1532 = vmul.f32 %v1516, %v1501
        %v1533 = vmul.f32 %v1517, %v1501
        %v1534 = vmul.f32 %v1518, %v1503
        %v1535 = vmul.f32 %v1519, %v1503
        %v1536 = vmul.f32 %v1520, %v1505
        %v1537 = vmul.f32 %v1521, %v1505
        %v1538 = vmul.f32 %v1522, %v1507
        %v1539 = vmul.f32 %v1523, %v1507
        %v1540 = vmul.f32 %v1524, %v1509
        %v1541 = vmul.f32 %v1525, %v1509
        %v1542 = vmul.f32 %v1526, %v1511
        %v1543 = vmul.f32 %v1527, %v1511
        %v1544 = vmul.f32 %v1528, %v1513
        %v1545 = vmul.f32 %v1529, %v1513
        %v1546 = vmul.f32 %v1530, %v1515
        %v1547 = vmul.f32 %v1531, %v1515
        %v1548 = vmax.f32 %v1532, 0.0
        %v1549 = vmax.f32 %v1533, 0.0
        %v1550 = vmax.f32 %v1534, 0.0
        %v1551 = vmax.f32 %v1535, 0.0
        %v1552 = vmax.f32 %v1536, 0.0
        %v1553 = vmax.f32 %v1537, 0.0
        %v1554 = vmax.f32 %v1538, 0.0
        %v1555 = vmax.f32 %v1539, 0.0
        %v1556 = vmax.f32 %v1540, 0.0
        %v1557 = vmax.f32 %v1541, 0.0
        %v1558 = vmax.f32 %v1542, 0.0
        %v1559 = vmax.f32 %v1543, 0.0
        %v1560 = vmax.f32 %v1544, 0.0
        %v1561 = vmax.f32 %v1545, 0.0
        %v1562 = vmax.f32 %v1546, 0.0
        %v1563 = vmax.f32 %v1547, 0.0
        %v1564 = vld [vmem:[%s3] sm:$0xff]
        %v1565 = vlaneseq
        %v1566 = vshrl.u32 %v1565, 7
        %v1567 = vsub.s32 0, %v1566
        %v1568 = vrot.slane %v373, %v1567
        %v1570 = vsel %vm1171, %v1548, 0
        %v1573 = vsel %vm1171, %v1549, 0
        %v1576 = vsel %vm1171, %v1550, 0
        %v1579 = vsel %vm1171, %v1551, 0
        %v1582 = vsel %vm1171, %v1552, 0
        %v1585 = vsel %vm1171, %v1553, 0
        %v1588 = vsel %vm1171, %v1554, 0
        %v1591 = vsel %vm1171, %v1555, 0
        %v1594 = vsel %vm1171, %v1556, 0
        %v1597 = vsel %vm1171, %v1557, 0
        %v1600 = vsel %vm1171, %v1558, 0
        %v1603 = vsel %vm1171, %v1559, 0
        %v1606 = vsel %vm1171, %v1560, 0
        %v1609 = vsel %vm1171, %v1561, 0
        %v1612 = vsel %vm1171, %v1562, 0
        %v1615 = vsel %vm1171, %v1563, 0
        %1617 = vmatprep.subr.mxu0 0.0
        %1618 = vmatpush1.msra.mxu0 0.0
        %1619 = vmatprep.subr.mxu0 0.0
        %1620 = vmatpush1.msra.mxu0 0.0
        %1621 = vmatprep.subr.mxu0 0.0
        %1622 = vmatpush1.msra.mxu0 0.0
        %1623 = vmatprep.subr.mxu0 0.0
        %1624 = vmatpush1.msra.mxu0 0.0
        %1625 = vmatprep.subr.mxu0 0.0
        %1626 = vmatpush1.msra.mxu0 0.0
        %1627 = vmatprep.subr.mxu0 0.0
        %1628 = vmatpush1.msra.mxu0 0.0
        %1629 = vmatprep.subr.mxu0 0.0
        %1630 = vmatpush1.msra.mxu0 0.0
        %1631 = vmatprep.subr.mxu0 0.0
        %1632 = vmatpush1.msra.mxu0 0.0
        %1633 = vmatprep.subr.mxu0 0.0
        %1634 = vmatpush1.msra.mxu0 0.0
        %1635 = vmatprep.subr.mxu0 0.0
        %1636 = vmatpush1.msra.mxu0 0.0
        %1637 = vmatprep.subr.mxu0 0.0
        %1638 = vmatpush1.msra.mxu0 0.0
        %1639 = vmatprep.subr.mxu0 0.0
        %1640 = vmatpush1.msra.mxu0 0.0
        %1641 = vmatprep.subr.mxu0 0.0
        %1642 = vmatpush1.msra.mxu0 0.0
        %1643 = vmatprep.subr.mxu0 0.0
        %1644 = vmatpush1.msra.mxu0 0.0
        %1645 = vmatprep.subr.mxu0 0.0
        %1646 = vmatpush1.msra.mxu0 0.0
        %1647 = vmatprep.subr.mxu0 0.0
        %1648 = vmatpush1.msra.mxu0 %v1564
        %1649 = vmatprep.subr.mxu0 0.0
        %1650 = vmatpush2.msra.mxu0 0.0
        %1651 = vmatprep.subr.mxu0 0.0
        %1652 = vmatpush2.msra.mxu0 0.0
        %1653 = vmatprep.subr.mxu0 0.0
        %1654 = vmatpush2.msra.mxu0 0.0
        %1655 = vmatprep.subr.mxu0 0.0
        %1656 = vmatpush2.msra.mxu0 0.0
        %1657 = vmatprep.subr.mxu0 0.0
        %1658 = vmatpush2.msra.mxu0 0.0
        %1659 = vmatprep.subr.mxu0 0.0
        %1660 = vmatpush2.msra.mxu0 0.0
        %1661 = vmatprep.subr.mxu0 0.0
        %1662 = vmatpush2.msra.mxu0 0.0
        %1663 = vmatprep.subr.mxu0 0.0
        %1664 = vmatpush2.msra.mxu0 0.0
        %1665 = vmatprep.subr.mxu0 0.0
        %1666 = vmatpush2.msra.mxu0 0.0
        %1667 = vmatprep.subr.mxu0 0.0
        %1668 = vmatpush2.msra.mxu0 0.0
        %1669 = vmatprep.subr.mxu0 0.0
        %1670 = vmatpush2.msra.mxu0 0.0
        %1671 = vmatprep.subr.mxu0 0.0
        %1672 = vmatpush2.msra.mxu0 0.0
        %1673 = vmatprep.subr.mxu0 0.0
        %1674 = vmatpush2.msra.mxu0 0.0
        %1675 = vmatprep.subr.mxu0 0.0
        %1676 = vmatpush2.msra.mxu0 0.0
        %1677 = vmatprep.subr.mxu0 0.0
        %1678 = vmatpush2.msra.mxu0 0.0
        %1679 = vmatprep.subr.mxu0 0.0
        %1680 = vmatpush2.msra.mxu0 0.0
        %1681 = vmatprep.mubr.f32.mxu0 0.0
        %1682 = vmatmul.mubr.f32.gmra.mxu0 %v1570
        %v1683 = vpop.f32.mrf.mxu0
        %v1684 = vadd.f32 %v1568, %v1683
        %v1685 = vpop.f32.mrf.mxu0
        %1686 = vmatprep.mubr.f32.mxu0 0.0
        %1687 = vmatmul.mubr.f32.gmra.mxu0 %v1573
        %v1688 = vpop.f32.mrf.mxu0
        %v1689 = vadd.f32 %v1568, %v1688
        %v1690 = vpop.f32.mrf.mxu0
        %1691 = vmatprep.mubr.f32.mxu0 0.0
        %1692 = vmatmul.mubr.f32.gmra.mxu0 %v1576
        %v1693 = vpop.f32.mrf.mxu0
        %v1694 = vadd.f32 %v1568, %v1693
        %v1695 = vpop.f32.mrf.mxu0
        %1696 = vmatprep.mubr.f32.mxu0 0.0
        %1697 = vmatmul.mubr.f32.gmra.mxu0 %v1579
        %v1698 = vpop.f32.mrf.mxu0
        %v1699 = vadd.f32 %v1568, %v1698
        %v1700 = vpop.f32.mrf.mxu0
        %1701 = vmatprep.mubr.f32.mxu0 0.0
        %1702 = vmatmul.mubr.f32.gmra.mxu0 %v1582
        %v1703 = vpop.f32.mrf.mxu0
        %v1704 = vadd.f32 %v1568, %v1703
        %v1705 = vpop.f32.mrf.mxu0
        %1706 = vmatprep.mubr.f32.mxu0 0.0
        %1707 = vmatmul.mubr.f32.gmra.mxu0 %v1585
        %v1708 = vpop.f32.mrf.mxu0
        %v1709 = vadd.f32 %v1568, %v1708
        %v1710 = vpop.f32.mrf.mxu0
        %1711 = vmatprep.mubr.f32.mxu0 0.0
        %1712 = vmatmul.mubr.f32.gmra.mxu0 %v1588
        %v1713 = vpop.f32.mrf.mxu0
        %v1714 = vadd.f32 %v1568, %v1713
        %v1715 = vpop.f32.mrf.mxu0
        %1716 = vmatprep.mubr.f32.mxu0 0.0
        %1717 = vmatmul.mubr.f32.gmra.mxu0 %v1591
        %v1718 = vpop.f32.mrf.mxu0
        %v1719 = vadd.f32 %v1568, %v1718
        %v1720 = vpop.f32.mrf.mxu0
        %1721 = vmatprep.mubr.f32.mxu0 0.0
        %1722 = vmatmul.mubr.f32.gmra.mxu0 %v1594
        %v1723 = vpop.f32.mrf.mxu0
        %v1724 = vadd.f32 %v1568, %v1723
        %v1725 = vpop.f32.mrf.mxu0
        %1726 = vmatprep.mubr.f32.mxu0 0.0
        %1727 = vmatmul.mubr.f32.gmra.mxu0 %v1597
        %v1728 = vpop.f32.mrf.mxu0
        %v1729 = vadd.f32 %v1568, %v1728
        %v1730 = vpop.f32.mrf.mxu0
        %1731 = vmatprep.mubr.f32.mxu0 0.0
        %1732 = vmatmul.mubr.f32.gmra.mxu0 %v1600
        %v1733 = vpop.f32.mrf.mxu0
        %v1734 = vadd.f32 %v1568, %v1733
        %v1735 = vpop.f32.mrf.mxu0
        %1736 = vmatprep.mubr.f32.mxu0 0.0
        %1737 = vmatmul.mubr.f32.gmra.mxu0 %v1603
        %v1738 = vpop.f32.mrf.mxu0
        %v1739 = vadd.f32 %v1568, %v1738
        %v1740 = vpop.f32.mrf.mxu0
        %1741 = vmatprep.mubr.f32.mxu0 0.0
        %1742 = vmatmul.mubr.f32.gmra.mxu0 %v1606
        %v1743 = vpop.f32.mrf.mxu0
        %v1744 = vadd.f32 %v1568, %v1743
        %v1745 = vpop.f32.mrf.mxu0
        %1746 = vmatprep.mubr.f32.mxu0 0.0
        %1747 = vmatmul.mubr.f32.gmra.mxu0 %v1609
        %v1748 = vpop.f32.mrf.mxu0
        %v1749 = vadd.f32 %v1568, %v1748
        %v1750 = vpop.f32.mrf.mxu0
        %1751 = vmatprep.mubr.f32.mxu0 0.0
        %1752 = vmatmul.mubr.f32.gmra.mxu0 %v1612
        %v1753 = vpop.f32.mrf.mxu0
        %v1754 = vadd.f32 %v1568, %v1753
        %v1755 = vpop.f32.mrf.mxu0
        %1756 = vmatprep.mubr.f32.mxu0 0.0
        %1757 = vmatmul.mubr.f32.gmra.mxu0 %v1615
        %v1758 = vpop.f32.mrf.mxu0
        %v1759 = vadd.f32 %v1568, %v1758
        %v1760 = vpop.f32.mrf.mxu0
        %1761 = vdwg.mxu0
        %v1762 = vadd.f32 %v1684, 0.0
        %v1763 = vadd.f32 %v1689, 0.0
        %v1764 = vadd.f32 %v1694, 0.0
        %v1765 = vadd.f32 %v1699, 0.0
        %v1766 = vadd.f32 %v1704, 0.0
        %v1767 = vadd.f32 %v1709, 0.0
        %v1768 = vadd.f32 %v1714, 0.0
        %v1769 = vadd.f32 %v1719, 0.0
        %v1770 = vadd.f32 %v1724, 0.0
        %v1771 = vadd.f32 %v1729, 0.0
        %v1772 = vadd.f32 %v1734, 0.0
        %v1773 = vadd.f32 %v1739, 0.0
        %v1774 = vadd.f32 %v1744, 0.0
        %v1775 = vadd.f32 %v1749, 0.0
        %v1776 = vadd.f32 %v1754, 0.0
        %v1777 = vadd.f32 %v1759, 0.0
        %vm1778 = vcmask 7168
        %v1779 = vsel %vm1778, %v1762, 0.0
        %v1780 = vsel %vm1778, %v1763, 0.0
        %v1781 = vadd.f32 %v1779, %v1780
        %v1782 = vrot.slane %v1781, 4
        %v1783 = vadd.f32 %v1781, %v1782
        %v1784 = vrot.slane %v1783, 2
        %v1785 = vadd.f32 %v1783, %v1784
        %v1786 = vrot.slane %v1785, 1
        %v1787 = vadd.f32 %v1785, %v1786
        %v1788 = vsel %vm1778, %v1764, 0.0
        %v1789 = vsel %vm1778, %v1765, 0.0
        %v1790 = vadd.f32 %v1788, %v1789
        %v1791 = vrot.slane %v1790, 4
        %v1792 = vadd.f32 %v1790, %v1791
        %v1793 = vrot.slane %v1792, 2
        %v1794 = vadd.f32 %v1792, %v1793
        %v1795 = vrot.slane %v1794, 1
        %v1796 = vadd.f32 %v1794, %v1795
        %v1797 = vsel %vm1778, %v1766, 0.0
        %v1798 = vsel %vm1778, %v1767, 0.0
        %v1799 = vadd.f32 %v1797, %v1798
        %v1800 = vrot.slane %v1799, 4
        %v1801 = vadd.f32 %v1799, %v1800
        %v1802 = vrot.slane %v1801, 2
        %v1803 = vadd.f32 %v1801, %v1802
        %v1804 = vrot.slane %v1803, 1
        %v1805 = vadd.f32 %v1803, %v1804
        %v1806 = vsel %vm1778, %v1768, 0.0
        %v1807 = vsel %vm1778, %v1769, 0.0
        %v1808 = vadd.f32 %v1806, %v1807
        %v1809 = vrot.slane %v1808, 4
        %v1810 = vadd.f32 %v1808, %v1809
        %v1811 = vrot.slane %v1810, 2
        %v1812 = vadd.f32 %v1810, %v1811
        %v1813 = vrot.slane %v1812, 1
        %v1814 = vadd.f32 %v1812, %v1813
        %v1815 = vsel %vm1778, %v1770, 0.0
        %v1816 = vsel %vm1778, %v1771, 0.0
        %v1817 = vadd.f32 %v1815, %v1816
        %v1818 = vrot.slane %v1817, 4
        %v1819 = vadd.f32 %v1817, %v1818
        %v1820 = vrot.slane %v1819, 2
        %v1821 = vadd.f32 %v1819, %v1820
        %v1822 = vrot.slane %v1821, 1
        %v1823 = vadd.f32 %v1821, %v1822
        %v1824 = vsel %vm1778, %v1772, 0.0
        %v1825 = vsel %vm1778, %v1773, 0.0
        %v1826 = vadd.f32 %v1824, %v1825
        %v1827 = vrot.slane %v1826, 4
        %v1828 = vadd.f32 %v1826, %v1827
        %v1829 = vrot.slane %v1828, 2
        %v1830 = vadd.f32 %v1828, %v1829
        %v1831 = vrot.slane %v1830, 1
        %v1832 = vadd.f32 %v1830, %v1831
        %v1833 = vsel %vm1778, %v1774, 0.0
        %v1834 = vsel %vm1778, %v1775, 0.0
        %v1835 = vadd.f32 %v1833, %v1834
        %v1836 = vrot.slane %v1835, 4
        %v1837 = vadd.f32 %v1835, %v1836
        %v1838 = vrot.slane %v1837, 2
        %v1839 = vadd.f32 %v1837, %v1838
        %v1840 = vrot.slane %v1839, 1
        %v1841 = vadd.f32 %v1839, %v1840
        %v1842 = vsel %vm1778, %v1776, 0.0
        %v1843 = vsel %vm1778, %v1777, 0.0
        %v1844 = vadd.f32 %v1842, %v1843
        %v1845 = vrot.slane %v1844, 4
        %v1846 = vadd.f32 %v1844, %v1845
        %v1847 = vrot.slane %v1846, 2
        %v1848 = vadd.f32 %v1846, %v1847
        %v1849 = vrot.slane %v1848, 1
        %v1850 = vadd.f32 %v1848, %v1849
        %v1851 = vmul.f32 %v1684, %v1684
        %v1852 = vmul.f32 %v1689, %v1689
        %v1853 = vmul.f32 %v1694, %v1694
        %v1854 = vmul.f32 %v1699, %v1699
        %v1855 = vmul.f32 %v1704, %v1704
        %v1856 = vmul.f32 %v1709, %v1709
        %v1857 = vmul.f32 %v1714, %v1714
        %v1858 = vmul.f32 %v1719, %v1719
        %v1859 = vmul.f32 %v1724, %v1724
        %v1860 = vmul.f32 %v1729, %v1729
        %v1861 = vmul.f32 %v1734, %v1734
        %v1862 = vmul.f32 %v1739, %v1739
        %v1863 = vmul.f32 %v1744, %v1744
        %v1864 = vmul.f32 %v1749, %v1749
        %v1865 = vmul.f32 %v1754, %v1754
        %v1866 = vmul.f32 %v1759, %v1759
        %v1867 = vadd.f32 %v1851, 0.0
        %v1868 = vadd.f32 %v1852, 0.0
        %v1869 = vadd.f32 %v1853, 0.0
        %v1870 = vadd.f32 %v1854, 0.0
        %v1871 = vadd.f32 %v1855, 0.0
        %v1872 = vadd.f32 %v1856, 0.0
        %v1873 = vadd.f32 %v1857, 0.0
        %v1874 = vadd.f32 %v1858, 0.0
        %v1875 = vadd.f32 %v1859, 0.0
        %v1876 = vadd.f32 %v1860, 0.0
        %v1877 = vadd.f32 %v1861, 0.0
        %v1878 = vadd.f32 %v1862, 0.0
        %v1879 = vadd.f32 %v1863, 0.0
        %v1880 = vadd.f32 %v1864, 0.0
        %v1881 = vadd.f32 %v1865, 0.0
        %v1882 = vadd.f32 %v1866, 0.0
        %v1883 = vsel %vm1778, %v1867, 0.0
        %v1884 = vsel %vm1778, %v1868, 0.0
        %v1885 = vadd.f32 %v1883, %v1884
        %v1886 = vrot.slane %v1885, 4
        %v1887 = vadd.f32 %v1885, %v1886
        %v1888 = vrot.slane %v1887, 2
        %v1889 = vadd.f32 %v1887, %v1888
        %v1890 = vrot.slane %v1889, 1
        %v1891 = vadd.f32 %v1889, %v1890
        %v1892 = vsel %vm1778, %v1869, 0.0
        %v1893 = vsel %vm1778, %v1870, 0.0
        %v1894 = vadd.f32 %v1892, %v1893
        %v1895 = vrot.slane %v1894, 4
        %v1896 = vadd.f32 %v1894, %v1895
        %v1897 = vrot.slane %v1896, 2
        %v1898 = vadd.f32 %v1896, %v1897
        %v1899 = vrot.slane %v1898, 1
        %v1900 = vadd.f32 %v1898, %v1899
        %v1901 = vsel %vm1778, %v1871, 0.0
        %v1902 = vsel %vm1778, %v1872, 0.0
        %v1903 = vadd.f32 %v1901, %v1902
        %v1904 = vrot.slane %v1903, 4
        %v1905 = vadd.f32 %v1903, %v1904
        %v1906 = vrot.slane %v1905, 2
        %v1907 = vadd.f32 %v1905, %v1906
        %v1908 = vrot.slane %v1907, 1
        %v1909 = vadd.f32 %v1907, %v1908
        %v1910 = vsel %vm1778, %v1873, 0.0
        %v1911 = vsel %vm1778, %v1874, 0.0
        %v1912 = vadd.f32 %v1910, %v1911
        %v1913 = vrot.slane %v1912, 4
        %v1914 = vadd.f32 %v1912, %v1913
        %v1915 = vrot.slane %v1914, 2
        %v1916 = vadd.f32 %v1914, %v1915
        %v1917 = vrot.slane %v1916, 1
        %v1918 = vadd.f32 %v1916, %v1917
        %v1919 = vsel %vm1778, %v1875, 0.0
        %v1920 = vsel %vm1778, %v1876, 0.0
        %v1921 = vadd.f32 %v1919, %v1920
        %v1922 = vrot.slane %v1921, 4
        %v1923 = vadd.f32 %v1921, %v1922
        %v1924 = vrot.slane %v1923, 2
        %v1925 = vadd.f32 %v1923, %v1924
        %v1926 = vrot.slane %v1925, 1
        %v1927 = vadd.f32 %v1925, %v1926
        %v1928 = vsel %vm1778, %v1877, 0.0
        %v1929 = vsel %vm1778, %v1878, 0.0
        %v1930 = vadd.f32 %v1928, %v1929
        %v1931 = vrot.slane %v1930, 4
        %v1932 = vadd.f32 %v1930, %v1931
        %v1933 = vrot.slane %v1932, 2
        %v1934 = vadd.f32 %v1932, %v1933
        %v1935 = vrot.slane %v1934, 1
        %v1936 = vadd.f32 %v1934, %v1935
        %v1937 = vsel %vm1778, %v1879, 0.0
        %v1938 = vsel %vm1778, %v1880, 0.0
        %v1939 = vadd.f32 %v1937, %v1938
        %v1940 = vrot.slane %v1939, 4
        %v1941 = vadd.f32 %v1939, %v1940
        %v1942 = vrot.slane %v1941, 2
        %v1943 = vadd.f32 %v1941, %v1942
        %v1944 = vrot.slane %v1943, 1
        %v1945 = vadd.f32 %v1943, %v1944
        %v1946 = vsel %vm1778, %v1881, 0.0
        %v1947 = vsel %vm1778, %v1882, 0.0
        %v1948 = vadd.f32 %v1946, %v1947
        %v1949 = vrot.slane %v1948, 4
        %v1950 = vadd.f32 %v1948, %v1949
        %v1951 = vrot.slane %v1950, 2
        %v1952 = vadd.f32 %v1950, %v1951
        %v1953 = vrot.slane %v1952, 1
        %v1954 = vadd.f32 %v1952, %v1953
        %v1955 = vmul.f32 %v1787, 0.0625
        %v1956 = vmul.f32 %v1796, 0.0625
        %v1957 = vmul.f32 %v1805, 0.0625
        %v1958 = vmul.f32 %v1814, 0.0625
        %v1959 = vmul.f32 %v1823, 0.0625
        %v1960 = vmul.f32 %v1832, 0.0625
        %v1961 = vmul.f32 %v1841, 0.0625
        %v1962 = vmul.f32 %v1850, 0.0625
        %v1963 = vmul.f32 %v1787, %v1955
        %v1964 = vmul.f32 %v1796, %v1956
        %v1965 = vmul.f32 %v1805, %v1957
        %v1966 = vmul.f32 %v1814, %v1958
        %v1967 = vmul.f32 %v1823, %v1959
        %v1968 = vmul.f32 %v1832, %v1960
        %v1969 = vmul.f32 %v1841, %v1961
        %v1970 = vmul.f32 %v1850, %v1962
        %v1971 = vsub.f32 %v1891, %v1963
        %v1972 = vsub.f32 %v1900, %v1964
        %v1973 = vsub.f32 %v1909, %v1965
        %v1974 = vsub.f32 %v1918, %v1966
        %v1975 = vsub.f32 %v1927, %v1967
        %v1976 = vsub.f32 %v1936, %v1968
        %v1977 = vsub.f32 %v1945, %v1969
        %v1978 = vsub.f32 %v1954, %v1970
        %v1979 = vmax.f32 %v1971, 0.0
        %v1980 = vmax.f32 %v1972, 0.0
        %v1981 = vmax.f32 %v1973, 0.0
        %v1982 = vmax.f32 %v1974, 0.0
        %v1983 = vmax.f32 %v1975, 0.0
        %v1984 = vmax.f32 %v1976, 0.0
        %v1985 = vmax.f32 %v1977, 0.0
        %v1986 = vmax.f32 %v1978, 0.0
        %v1987 = vmul.f32 %v1979, 0.06666667
        %v1988 = vmul.f32 %v1980, 0.06666667
        %v1989 = vmul.f32 %v1981, 0.06666667
        %v1990 = vmul.f32 %v1982, 0.06666667
        %v1991 = vmul.f32 %v1983, 0.06666667
        %v1992 = vmul.f32 %v1984, 0.06666667
        %v1993 = vmul.f32 %v1985, 0.06666667
        %v1994 = vmul.f32 %v1986, 0.06666667
        %v1995 = vrsqrt.pop %v1987
        %v1996 = vmul.f32 %v1987, %v1995
        %vm1997 = vcmp.eq.f32.partialorder %v1987, inf
        %v1998 = vsel %vm1997, %v1987, %v1996
        %vm1999 = vcmp.eq.f32.partialorder %v1987, 0.0
        %v2000 = vand.u32 %v1987, 2147483648
        %v2001 = vsel %vm1999, %v2000, %v1998
        %v2002 = vrsqrt.pop %v1988
        %v2003 = vmul.f32 %v1988, %v2002
        %vm2004 = vcmp.eq.f32.partialorder %v1988, inf
        %v2005 = vsel %vm2004, %v1988, %v2003
        %vm2006 = vcmp.eq.f32.partialorder %v1988, 0.0
        %v2007 = vand.u32 %v1988, 2147483648
        %v2008 = vsel %vm2006, %v2007, %v2005
        %v2009 = vrsqrt.pop %v1989
        %v2010 = vmul.f32 %v1989, %v2009
        %vm2011 = vcmp.eq.f32.partialorder %v1989, inf
        %v2012 = vsel %vm2011, %v1989, %v2010
        %vm2013 = vcmp.eq.f32.partialorder %v1989, 0.0
        %v2014 = vand.u32 %v1989, 2147483648
        %v2015 = vsel %vm2013, %v2014, %v2012
        %v2016 = vrsqrt.pop %v1990
        %v2017 = vmul.f32 %v1990, %v2016
        %vm2018 = vcmp.eq.f32.partialorder %v1990, inf
        %v2019 = vsel %vm2018, %v1990, %v2017
        %vm2020 = vcmp.eq.f32.partialorder %v1990, 0.0
        %v2021 = vand.u32 %v1990, 2147483648
        %v2022 = vsel %vm2020, %v2021, %v2019
        %v2023 = vrsqrt.pop %v1991
        %v2024 = vmul.f32 %v1991, %v2023
        %vm2025 = vcmp.eq.f32.partialorder %v1991, inf
        %v2026 = vsel %vm2025, %v1991, %v2024
        %vm2027 = vcmp.eq.f32.partialorder %v1991, 0.0
        %v2028 = vand.u32 %v1991, 2147483648
        %v2029 = vsel %vm2027, %v2028, %v2026
        %v2030 = vrsqrt.pop %v1992
        %v2031 = vmul.f32 %v1992, %v2030
        %vm2032 = vcmp.eq.f32.partialorder %v1992, inf
        %v2033 = vsel %vm2032, %v1992, %v2031
        %vm2034 = vcmp.eq.f32.partialorder %v1992, 0.0
        %v2035 = vand.u32 %v1992, 2147483648
        %v2036 = vsel %vm2034, %v2035, %v2033
        %v2037 = vrsqrt.pop %v1993
        %v2038 = vmul.f32 %v1993, %v2037
        %vm2039 = vcmp.eq.f32.partialorder %v1993, inf
        %v2040 = vsel %vm2039, %v1993, %v2038
        %vm2041 = vcmp.eq.f32.partialorder %v1993, 0.0
        %v2042 = vand.u32 %v1993, 2147483648
        %v2043 = vsel %vm2041, %v2042, %v2040
        %v2044 = vrsqrt.pop %v1994
        %v2045 = vmul.f32 %v1994, %v2044
        %vm2046 = vcmp.eq.f32.partialorder %v1994, inf
        %v2047 = vsel %vm2046, %v1994, %v2045
        %vm2048 = vcmp.eq.f32.partialorder %v1994, 0.0
        %v2049 = vand.u32 %v1994, 2147483648
        %v2050 = vsel %vm2048, %v2049, %v2047
        %v2051 = vadd.f32 %v2001, 0.001
        %v2052 = vadd.f32 %v2008, 0.001
        %v2053 = vadd.f32 %v2015, 0.001
        %v2054 = vadd.f32 %v2022, 0.001
        %v2055 = vadd.f32 %v2029, 0.001
        %v2056 = vadd.f32 %v2036, 0.001
        %v2057 = vadd.f32 %v2043, 0.001
        %v2058 = vadd.f32 %v2050, 0.001
        %v2059 = vrcp.pop %v2051
        %v2060 = vmul.f32 1.0, %v2059
        %v2061 = vrcp.pop %v2052
        %v2062 = vmul.f32 1.0, %v2061
        %v2063 = vrcp.pop %v2053
        %v2064 = vmul.f32 1.0, %v2063
        %v2065 = vrcp.pop %v2054
        %v2066 = vmul.f32 1.0, %v2065
        %v2067 = vrcp.pop %v2055
        %v2068 = vmul.f32 1.0, %v2067
        %v2069 = vrcp.pop %v2056
        %v2070 = vmul.f32 1.0, %v2069
        %v2071 = vrcp.pop %v2057
        %v2072 = vmul.f32 1.0, %v2071
        %v2073 = vrcp.pop %v2058
        %v2074 = vmul.f32 1.0, %v2073
        %v2075 = vsub.f32 %v1684, %v1955
        %v2076 = vsub.f32 %v1689, %v1955
        %v2077 = vsub.f32 %v1694, %v1956
        %v2078 = vsub.f32 %v1699, %v1956
        %v2079 = vsub.f32 %v1704, %v1957
        %v2080 = vsub.f32 %v1709, %v1957
        %v2081 = vsub.f32 %v1714, %v1958
        %v2082 = vsub.f32 %v1719, %v1958
        %v2083 = vsub.f32 %v1724, %v1959
        %v2084 = vsub.f32 %v1729, %v1959
        %v2085 = vsub.f32 %v1734, %v1960
        %v2086 = vsub.f32 %v1739, %v1960
        %v2087 = vsub.f32 %v1744, %v1961
        %v2088 = vsub.f32 %v1749, %v1961
        %v2089 = vsub.f32 %v1754, %v1962
        %v2090 = vsub.f32 %v1759, %v1962
        %v2091 = vmul.f32 %v2075, %v2060
        %v2092 = vmul.f32 %v2076, %v2060
        %v2093 = vmul.f32 %v2077, %v2062
        %v2094 = vmul.f32 %v2078, %v2062
        %v2095 = vmul.f32 %v2079, %v2064
        %v2096 = vmul.f32 %v2080, %v2064
        %v2097 = vmul.f32 %v2081, %v2066
        %v2098 = vmul.f32 %v2082, %v2066
        %v2099 = vmul.f32 %v2083, %v2068
        %v2100 = vmul.f32 %v2084, %v2068
        %v2101 = vmul.f32 %v2085, %v2070
        %v2102 = vmul.f32 %v2086, %v2070
        %v2103 = vmul.f32 %v2087, %v2072
        %v2104 = vmul.f32 %v2088, %v2072
        %v2105 = vmul.f32 %v2089, %v2074
        %v2106 = vmul.f32 %v2090, %v2074
        %2108 = vset.pattern.permute.xlu0 0
        %2109 = vperm.xlu0 %2108, %v2091
        %v2110 = vpop.permute.xlu0 %2109
        %2113 = vset.pattern.permute.xlu0 0
        %2114 = vperm.xlu0 %2113, %v2092
        %v2115 = vpop.permute.xlu0 %2114
        %2118 = vset.pattern.permute.xlu0 0
        %2119 = vperm.xlu0 %2118, %v2093
        %v2120 = vpop.permute.xlu0 %2119
        %2123 = vset.pattern.permute.xlu0 0
        %2124 = vperm.xlu0 %2123, %v2094
        %v2125 = vpop.permute.xlu0 %2124
        %2128 = vset.pattern.permute.xlu0 0
        %2129 = vperm.xlu0 %2128, %v2095
        %v2130 = vpop.permute.xlu0 %2129
        %2133 = vset.pattern.permute.xlu0 0
        %2134 = vperm.xlu0 %2133, %v2096
        %v2135 = vpop.permute.xlu0 %2134
        %2138 = vset.pattern.permute.xlu0 0
        %2139 = vperm.xlu0 %2138, %v2097
        %v2140 = vpop.permute.xlu0 %2139
        %2143 = vset.pattern.permute.xlu0 0
        %2144 = vperm.xlu0 %2143, %v2098
        %v2145 = vpop.permute.xlu0 %2144
        %2148 = vset.pattern.permute.xlu0 0
        %2149 = vperm.xlu0 %2148, %v2099
        %v2150 = vpop.permute.xlu0 %2149
        %2153 = vset.pattern.permute.xlu0 0
        %2154 = vperm.xlu0 %2153, %v2100
        %v2155 = vpop.permute.xlu0 %2154
        %2158 = vset.pattern.permute.xlu0 0
        %2159 = vperm.xlu0 %2158, %v2101
        %v2160 = vpop.permute.xlu0 %2159
        %2163 = vset.pattern.permute.xlu0 0
        %2164 = vperm.xlu0 %2163, %v2102
        %v2165 = vpop.permute.xlu0 %2164
        %2168 = vset.pattern.permute.xlu0 0
        %2169 = vperm.xlu0 %2168, %v2103
        %v2170 = vpop.permute.xlu0 %2169
        %2173 = vset.pattern.permute.xlu0 0
        %2174 = vperm.xlu0 %2173, %v2104
        %v2175 = vpop.permute.xlu0 %2174
        %2178 = vset.pattern.permute.xlu0 0
        %2179 = vperm.xlu0 %2178, %v2105
        %v2180 = vpop.permute.xlu0 %2179
        %2183 = vset.pattern.permute.xlu0 0
        %2184 = vperm.xlu0 %2183, %v2106
        %v2185 = vpop.permute.xlu0 %2184
        %v2187 = vmul.f32 %v2110, %v355
        %v2188 = vmul.f32 %v2115, %v356
        %v2189 = vmul.f32 %v2120, %v357
        %v2190 = vmul.f32 %v2125, %v358
        %v2191 = vmul.f32 %v2130, %v359
        %v2192 = vmul.f32 %v2135, %v360
        %v2193 = vmul.f32 %v2140, %v361
        %v2194 = vmul.f32 %v2145, %v362
        %v2195 = vmul.f32 %v2150, %v363
        %v2196 = vmul.f32 %v2155, %v364
        %v2197 = vmul.f32 %v2160, %v365
        %v2198 = vmul.f32 %v2165, %v366
        %v2199 = vmul.f32 %v2170, %v367
        %v2200 = vmul.f32 %v2175, %v368
        %v2201 = vmul.f32 %v2180, %v369
        %v2202 = vmul.f32 %v2185, %v370
        %v2203 = vsel %vm385, %v2187, 0.0
        %v2204 = vsel %vm385, %v2188, 0.0
        %v2205 = vadd.f32 %v2203, %v2204
        %v2206 = vrot.slane %v2205, 4
        %v2207 = vadd.f32 %v2205, %v2206
        %v2208 = vrot.slane %v2207, 2
        %v2209 = vadd.f32 %v2207, %v2208
        %v2210 = vrot.slane %v2209, 1
        %v2211 = vadd.f32 %v2209, %v2210
        %v2212 = vsel %vm385, %v2189, 0.0
        %v2213 = vsel %vm385, %v2190, 0.0
        %v2214 = vadd.f32 %v2212, %v2213
        %v2215 = vrot.slane %v2214, 4
        %v2216 = vadd.f32 %v2214, %v2215
        %v2217 = vrot.slane %v2216, 2
        %v2218 = vadd.f32 %v2216, %v2217
        %v2219 = vrot.slane %v2218, 1
        %v2220 = vadd.f32 %v2218, %v2219
        %v2221 = vsel %vm385, %v2191, 0.0
        %v2222 = vsel %vm385, %v2192, 0.0
        %v2223 = vadd.f32 %v2221, %v2222
        %v2224 = vrot.slane %v2223, 4
        %v2225 = vadd.f32 %v2223, %v2224
        %v2226 = vrot.slane %v2225, 2
        %v2227 = vadd.f32 %v2225, %v2226
        %v2228 = vrot.slane %v2227, 1
        %v2229 = vadd.f32 %v2227, %v2228
        %v2230 = vsel %vm385, %v2193, 0.0
        %v2231 = vsel %vm385, %v2194, 0.0
        %v2232 = vadd.f32 %v2230, %v2231
        %v2233 = vrot.slane %v2232, 4
        %v2234 = vadd.f32 %v2232, %v2233
        %v2235 = vrot.slane %v2234, 2
        %v2236 = vadd.f32 %v2234, %v2235
        %v2237 = vrot.slane %v2236, 1
        %v2238 = vadd.f32 %v2236, %v2237
        %v2239 = vsel %vm385, %v2195, 0.0
        %v2240 = vsel %vm385, %v2196, 0.0
        %v2241 = vadd.f32 %v2239, %v2240
        %v2242 = vrot.slane %v2241, 4
        %v2243 = vadd.f32 %v2241, %v2242
        %v2244 = vrot.slane %v2243, 2
        %v2245 = vadd.f32 %v2243, %v2244
        %v2246 = vrot.slane %v2245, 1
        %v2247 = vadd.f32 %v2245, %v2246
        %v2248 = vsel %vm385, %v2197, 0.0
        %v2249 = vsel %vm385, %v2198, 0.0
        %v2250 = vadd.f32 %v2248, %v2249
        %v2251 = vrot.slane %v2250, 4
        %v2252 = vadd.f32 %v2250, %v2251
        %v2253 = vrot.slane %v2252, 2
        %v2254 = vadd.f32 %v2252, %v2253
        %v2255 = vrot.slane %v2254, 1
        %v2256 = vadd.f32 %v2254, %v2255
        %v2257 = vsel %vm385, %v2199, 0.0
        %v2258 = vsel %vm385, %v2200, 0.0
        %v2259 = vadd.f32 %v2257, %v2258
        %v2260 = vrot.slane %v2259, 4
        %v2261 = vadd.f32 %v2259, %v2260
        %v2262 = vrot.slane %v2261, 2
        %v2263 = vadd.f32 %v2261, %v2262
        %v2264 = vrot.slane %v2263, 1
        %v2265 = vadd.f32 %v2263, %v2264
        %v2266 = vsel %vm385, %v2201, 0.0
        %v2267 = vsel %vm385, %v2202, 0.0
        %v2268 = vadd.f32 %v2266, %v2267
        %v2269 = vrot.slane %v2268, 4
        %v2270 = vadd.f32 %v2268, %v2269
        %v2271 = vrot.slane %v2270, 2
        %v2272 = vadd.f32 %v2270, %v2271
        %v2273 = vrot.slane %v2272, 1
        %v2274 = vadd.f32 %v2272, %v2273
        %vm2283 = vcmask 1041409
        %v2284 = vsel %vm2283, %v2220, %v2211
        %vm2285 = vcmask 1042434
        %v2286 = vsel %vm2285, %v2229, %v2284
        %vm2287 = vcmask 1043459
        %v2288 = vsel %vm2287, %v2238, %v2286
        %vm2289 = vcmask 1044484
        %v2290 = vsel %vm2289, %v2247, %v2288
        %vm2291 = vcmask 1045509
        %v2292 = vsel %vm2291, %v2256, %v2290
        %vm2293 = vcmask 1046534
        %v2294 = vsel %vm2293, %v2265, %v2292
        %vm2295 = vcmask 1047559
        %v2296 = vsel %vm2295, %v2274, %v2294
        %v2298 = vsel %vm385, %v2296, 0.0
        %2299 = vadd.xlane.f32.xlu0 %v2298
        %v2300 = vpop.xlane.xlu0 %2299
        %v2301 = vmul.f32 %v2211, %v2211
        %v2302 = vmul.f32 %v2220, %v2220
        %v2303 = vmul.f32 %v2229, %v2229
        %v2304 = vmul.f32 %v2238, %v2238
        %v2305 = vmul.f32 %v2247, %v2247
        %v2306 = vmul.f32 %v2256, %v2256
        %v2307 = vmul.f32 %v2265, %v2265
        %v2308 = vmul.f32 %v2274, %v2274
        %v2317 = vsel %vm2283, %v2302, %v2301
        %v2318 = vsel %vm2285, %v2303, %v2317
        %v2319 = vsel %vm2287, %v2304, %v2318
        %v2320 = vsel %vm2289, %v2305, %v2319
        %v2321 = vsel %vm2291, %v2306, %v2320
        %v2322 = vsel %vm2293, %v2307, %v2321
        %v2323 = vsel %vm2295, %v2308, %v2322
        %v2325 = vsel %vm385, %v2323, 0.0
        %2326 = vadd.xlane.f32.xlu0 %v2325
        %v2327 = vpop.xlane.xlu0 %2326
        %v2328 = vmul.f32 %v2300, 0.03125
        %v2329 = vmul.f32 %v2300, %v2328
        %v2330 = vsub.f32 %v2327, %v2329
        %v2331 = vmax.f32 %v2330, 0.0
        %v2332 = vmul.f32 %v2331, 0.032258064
        %v2333 = vrsqrt.pop %v2332
        %v2334 = vmul.f32 %v2332, %v2333
        %vm2335 = vcmp.eq.f32.partialorder %v2332, inf
        %v2336 = vsel %vm2335, %v2332, %v2334
        %vm2337 = vcmp.eq.f32.partialorder %v2332, 0.0
        %v2338 = vand.u32 %v2332, 2147483648
        %v2339 = vsel %vm2337, %v2338, %v2336
        %v2340 = vadd.f32 %v2339, 0.001
        %v2341 = vrcp.pop %v2340
        %v2342 = vmul.f32 1.0, %v2341
        %v2344 = vrot.slane %v2328, 1
        %v2345 = vrot.slane %v2328, 2
        %v2346 = vrot.slane %v2328, 3
        %v2347 = vrot.slane %v2328, 4
        %v2348 = vrot.slane %v2328, 5
        %v2349 = vrot.slane %v2328, 6
        %v2350 = vrot.slane %v2328, 7
        %v2359 = vsub.f32 %v2211, %v2328
        %v2360 = vsub.f32 %v2220, %v2344
        %v2361 = vsub.f32 %v2229, %v2345
        %v2362 = vsub.f32 %v2238, %v2346
        %v2363 = vsub.f32 %v2247, %v2347
        %v2364 = vsub.f32 %v2256, %v2348
        %v2365 = vsub.f32 %v2265, %v2349
        %v2366 = vsub.f32 %v2274, %v2350
        %v2368 = vrot.slane %v2342, 1
        %v2369 = vrot.slane %v2342, 2
        %v2370 = vrot.slane %v2342, 3
        %v2371 = vrot.slane %v2342, 4
        %v2372 = vrot.slane %v2342, 5
        %v2373 = vrot.slane %v2342, 6
        %v2374 = vrot.slane %v2342, 7
        %v2383 = vmul.f32 %v2359, %v2342
        %v2384 = vmul.f32 %v2360, %v2368
        %v2385 = vmul.f32 %v2361, %v2369
        %v2386 = vmul.f32 %v2362, %v2370
        %v2387 = vmul.f32 %v2363, %v2371
        %v2388 = vmul.f32 %v2364, %v2372
        %v2389 = vmul.f32 %v2365, %v2373
        %v2390 = vmul.f32 %v2366, %v2374
        %v2391 = vld [vmem:[#allocation5] sm:$0xff]
        %v2392 = vld [vmem:[#allocation5 + $0x8] sm:$0xff]
        %v2393 = vld [vmem:[#allocation5 + $0x10] sm:$0xff]
        %v2394 = vld [vmem:[#allocation5 + $0x18] sm:$0xff]
        %v2395 = vlaneseq
        %v2396 = vshrl.u32 %v2395, 7
        %v2397 = vsub.s32 0, %v2396
        %v2398 = vrot.slane %v374, %v2397
        %v2407 = vrot.slane %v2384, 7
        %v2408 = vsel %vm2283, %v2407, %v2383
        %v2409 = vrot.slane %v2385, 6
        %v2410 = vsel %vm2285, %v2409, %v2408
        %v2411 = vrot.slane %v2386, 5
        %v2412 = vsel %vm2287, %v2411, %v2410
        %v2413 = vrot.slane %v2387, 4
        %v2414 = vsel %vm2289, %v2413, %v2412
        %v2415 = vrot.slane %v2388, 3
        %v2416 = vsel %vm2291, %v2415, %v2414
        %v2417 = vrot.slane %v2389, 2
        %v2418 = vsel %vm2293, %v2417, %v2416
        %v2419 = vrot.slane %v2390, 1
        %v2420 = vsel %vm2295, %v2419, %v2418
        %v2421 = vsel %vm385, %v2420, 0
        %2423 = vmatprep.subr.mxu0 0.0
        %2424 = vmatpush1.msra.mxu0 0.0
        %2425 = vmatprep.subr.mxu0 0.0
        %2426 = vmatpush1.msra.mxu0 0.0
        %2427 = vmatprep.subr.mxu0 0.0
        %2428 = vmatpush1.msra.mxu0 0.0
        %2429 = vmatprep.subr.mxu0 0.0
        %2430 = vmatpush1.msra.mxu0 0.0
        %2431 = vmatprep.subr.mxu0 0.0
        %2432 = vmatpush1.msra.mxu0 0.0
        %2433 = vmatprep.subr.mxu0 0.0
        %2434 = vmatpush1.msra.mxu0 0.0
        %2435 = vmatprep.subr.mxu0 0.0
        %2436 = vmatpush1.msra.mxu0 0.0
        %2437 = vmatprep.subr.mxu0 0.0
        %2438 = vmatpush1.msra.mxu0 0.0
        %2439 = vmatprep.subr.mxu0 0.0
        %2440 = vmatpush1.msra.mxu0 0.0
        %2441 = vmatprep.subr.mxu0 0.0
        %2442 = vmatpush1.msra.mxu0 0.0
        %2443 = vmatprep.subr.mxu0 0.0
        %2444 = vmatpush1.msra.mxu0 0.0
        %2445 = vmatprep.subr.mxu0 0.0
        %2446 = vmatpush1.msra.mxu0 0.0
        %2447 = vmatprep.subr.mxu0 0.0
        %2448 = vmatpush1.msra.mxu0 %v2394
        %2449 = vmatprep.subr.mxu0 0.0
        %2450 = vmatpush1.msra.mxu0 %v2393
        %2451 = vmatprep.subr.mxu0 0.0
        %2452 = vmatpush1.msra.mxu0 %v2392
        %2453 = vmatprep.subr.mxu0 0.0
        %2454 = vmatpush1.msra.mxu0 %v2391
        %2455 = vmatprep.subr.mxu0 0.0
        %2456 = vmatpush2.msra.mxu0 0.0
        %2457 = vmatprep.subr.mxu0 0.0
        %2458 = vmatpush2.msra.mxu0 0.0
        %2459 = vmatprep.subr.mxu0 0.0
        %2460 = vmatpush2.msra.mxu0 0.0
        %2461 = vmatprep.subr.mxu0 0.0
        %2462 = vmatpush2.msra.mxu0 0.0
        %2463 = vmatprep.subr.mxu0 0.0
        %2464 = vmatpush2.msra.mxu0 0.0
        %2465 = vmatprep.subr.mxu0 0.0
        %2466 = vmatpush2.msra.mxu0 0.0
        %2467 = vmatprep.subr.mxu0 0.0
        %2468 = vmatpush2.msra.mxu0 0.0
        %2469 = vmatprep.subr.mxu0 0.0
        %2470 = vmatpush2.msra.mxu0 0.0
        %2471 = vmatprep.subr.mxu0 0.0
        %2472 = vmatpush2.msra.mxu0 0.0
        %2473 = vmatprep.subr.mxu0 0.0
        %2474 = vmatpush2.msra.mxu0 0.0
        %2475 = vmatprep.subr.mxu0 0.0
        %2476 = vmatpush2.msra.mxu0 0.0
        %2477 = vmatprep.subr.mxu0 0.0
        %2478 = vmatpush2.msra.mxu0 0.0
        %2479 = vmatprep.subr.mxu0 0.0
        %2480 = vmatpush2.msra.mxu0 0.0
        %2481 = vmatprep.subr.mxu0 0.0
        %2482 = vmatpush2.msra.mxu0 0.0
        %2483 = vmatprep.subr.mxu0 0.0
        %2484 = vmatpush2.msra.mxu0 0.0
        %2485 = vmatprep.subr.mxu0 0.0
        %2486 = vmatpush2.msra.mxu0 0.0
        %2487 = vmatprep.mubr.f32.mxu0 0.0
        %2488 = vmatmul.mubr.f32.gmra.mxu0 %v2421
        %v2489 = vpop.f32.mrf.mxu0
        %v2490 = vadd.f32 %v2398, %v2489
        %v2491 = vpop.f32.mrf.mxu0
        %2492 = vdwg.mxu0
        %vm2493 = vcmask 523264
        %v2494 = vsel %vm2493, %v2490, 0.0
        %2495 = vadd.xlane.f32.xlu0 %v2494
        %v2496 = vpop.xlane.xlu0 %2495
        %v2497 = vmul.f32 %v2490, %v2490
        %v2498 = vsel %vm2493, %v2497, 0.0
        %2499 = vadd.xlane.f32.xlu0 %v2498
        %v2500 = vpop.xlane.xlu0 %2499
        %v2501 = vmul.f32 %v2496, 0.015625
        %v2502 = vmul.f32 %v2496, %v2501
        %v2503 = vsub.f32 %v2500, %v2502
        %v2504 = vmax.f32 %v2503, 0.0
        %v2505 = vmul.f32 %v2504, 0.015873017
        %v2506 = vrsqrt.pop %v2505
        %v2507 = vmul.f32 %v2505, %v2506
        %vm2508 = vcmp.eq.f32.partialorder %v2505, inf
        %v2509 = vsel %vm2508, %v2505, %v2507
        %vm2510 = vcmp.eq.f32.partialorder %v2505, 0.0
        %v2511 = vand.u32 %v2505, 2147483648
        %v2512 = vsel %vm2510, %v2511, %v2509
        %v2513 = vadd.f32 %v2512, 0.001
        %v2514 = vrcp.pop %v2513
        %v2515 = vmul.f32 1.0, %v2514
        %v2516 = vsub.f32 %v2490, %v2501
        %v2517 = vmul.f32 %v2516, %v2515
        %v2518 = vmax.f32 %v2517, 0.0
        %v2519 = vld [vmem:[%s5] sm:$0xff]
        %v2520 = vld [vmem:[%s5 + $0x8] sm:$0xff]
        %v2521 = vld [vmem:[%s5 + $0x10] sm:$0xff]
        %v2522 = vld [vmem:[%s5 + $0x18] sm:$0xff]
        %v2523 = vld [vmem:[%s5 + $0x20] sm:$0xff]
        %v2524 = vld [vmem:[%s5 + $0x28] sm:$0xff]
        %v2525 = vld [vmem:[%s5 + $0x30] sm:$0xff]
        %v2526 = vld [vmem:[%s5 + $0x38] sm:$0xff]
        %v2527 = vlaneseq
        %v2528 = vshrl.u32 %v2527, 7
        %v2529 = vsub.s32 0, %v2528
        %v2530 = vrot.slane %v375, %v2529
        %v2532 = vsel %vm2493, %v2518, 0
        %2534 = vmatprep.subr.mxu0 0.0
        %2535 = vmatpush1.msra.mxu0 0.0
        %2536 = vmatprep.subr.mxu0 0.0
        %2537 = vmatpush1.msra.mxu0 0.0
        %2538 = vmatprep.subr.mxu0 0.0
        %2539 = vmatpush1.msra.mxu0 0.0
        %2540 = vmatprep.subr.mxu0 0.0
        %2541 = vmatpush1.msra.mxu0 0.0
        %2542 = vmatprep.subr.mxu0 0.0
        %2543 = vmatpush1.msra.mxu0 0.0
        %2544 = vmatprep.subr.mxu0 0.0
        %2545 = vmatpush1.msra.mxu0 0.0
        %2546 = vmatprep.subr.mxu0 0.0
        %2547 = vmatpush1.msra.mxu0 0.0
        %2548 = vmatprep.subr.mxu0 0.0
        %2549 = vmatpush1.msra.mxu0 0.0
        %2550 = vmatprep.subr.mxu0 0.0
        %2551 = vmatpush1.msra.mxu0 %v2526
        %2552 = vmatprep.subr.mxu0 0.0
        %2553 = vmatpush1.msra.mxu0 %v2525
        %2554 = vmatprep.subr.mxu0 0.0
        %2555 = vmatpush1.msra.mxu0 %v2524
        %2556 = vmatprep.subr.mxu0 0.0
        %2557 = vmatpush1.msra.mxu0 %v2523
        %2558 = vmatprep.subr.mxu0 0.0
        %2559 = vmatpush1.msra.mxu0 %v2522
        %2560 = vmatprep.subr.mxu0 0.0
        %2561 = vmatpush1.msra.mxu0 %v2521
        %2562 = vmatprep.subr.mxu0 0.0
        %2563 = vmatpush1.msra.mxu0 %v2520
        %2564 = vmatprep.subr.mxu0 0.0
        %2565 = vmatpush1.msra.mxu0 %v2519
        %2566 = vmatprep.subr.mxu0 0.0
        %2567 = vmatpush2.msra.mxu0 0.0
        %2568 = vmatprep.subr.mxu0 0.0
        %2569 = vmatpush2.msra.mxu0 0.0
        %2570 = vmatprep.subr.mxu0 0.0
        %2571 = vmatpush2.msra.mxu0 0.0
        %2572 = vmatprep.subr.mxu0 0.0
        %2573 = vmatpush2.msra.mxu0 0.0
        %2574 = vmatprep.subr.mxu0 0.0
        %2575 = vmatpush2.msra.mxu0 0.0
        %2576 = vmatprep.subr.mxu0 0.0
        %2577 = vmatpush2.msra.mxu0 0.0
        %2578 = vmatprep.subr.mxu0 0.0
        %2579 = vmatpush2.msra.mxu0 0.0
        %2580 = vmatprep.subr.mxu0 0.0
        %2581 = vmatpush2.msra.mxu0 0.0
        %2582 = vmatprep.subr.mxu0 0.0
        %2583 = vmatpush2.msra.mxu0 0.0
        %2584 = vmatprep.subr.mxu0 0.0
        %2585 = vmatpush2.msra.mxu0 0.0
        %2586 = vmatprep.subr.mxu0 0.0
        %2587 = vmatpush2.msra.mxu0 0.0
        %2588 = vmatprep.subr.mxu0 0.0
        %2589 = vmatpush2.msra.mxu0 0.0
        %2590 = vmatprep.subr.mxu0 0.0
        %2591 = vmatpush2.msra.mxu0 0.0
        %2592 = vmatprep.subr.mxu0 0.0
        %2593 = vmatpush2.msra.mxu0 0.0
        %2594 = vmatprep.subr.mxu0 0.0
        %2595 = vmatpush2.msra.mxu0 0.0
        %2596 = vmatprep.subr.mxu0 0.0
        %2597 = vmatpush2.msra.mxu0 0.0
        %2598 = vmatprep.mubr.f32.mxu0 0.0
        %2599 = vmatmul.mubr.f32.gmra.mxu0 %v2532
        %v2600 = vpop.f32.mrf.mxu0
        %v2601 = vadd.f32 %v2530, %v2600
        %v2602 = vpop.f32.mrf.mxu0
        %2603 = vdwg.mxu0
        %2604 = vadd.xlane.f32.xlu0 %v2601
        %v2605 = vpop.xlane.xlu0 %2604
        %v2606 = vmul.f32 %v2601, %v2601
        %2607 = vadd.xlane.f32.xlu0 %v2606
        %v2608 = vpop.xlane.xlu0 %2607
        %v2609 = vmul.f32 %v2605, 0.0078125
        %v2610 = vmul.f32 %v2605, %v2609
        %v2611 = vsub.f32 %v2608, %v2610
        %v2612 = vmax.f32 %v2611, 0.0
        %v2613 = vmul.f32 %v2612, 0.007874016
        %v2614 = vrsqrt.pop %v2613
        %v2615 = vmul.f32 %v2613, %v2614
        %vm2616 = vcmp.eq.f32.partialorder %v2613, inf
        %v2617 = vsel %vm2616, %v2613, %v2615
        %vm2618 = vcmp.eq.f32.partialorder %v2613, 0.0
        %v2619 = vand.u32 %v2613, 2147483648
        %v2620 = vsel %vm2618, %v2619, %v2617
        %v2621 = vadd.f32 %v2620, 0.001
        %v2622 = vrcp.pop %v2621
        %v2623 = vmul.f32 1.0, %v2622
        %v2624 = vsub.f32 %v2601, %v2609
        %v2625 = vmul.f32 %v2624, %v2623
        %v2626 = vmax.f32 %v2625, 0.0
        %v2627 = vld [vmem:[#allocation7] sm:$0xff]
        %v2628 = vld [vmem:[#allocation7 + $0x8] sm:$0xff]
        %v2629 = vld [vmem:[#allocation7 + $0x10] sm:$0xff]
        %v2630 = vld [vmem:[#allocation7 + $0x18] sm:$0xff]
        %v2631 = vld [vmem:[#allocation7 + $0x20] sm:$0xff]
        %v2632 = vld [vmem:[#allocation7 + $0x28] sm:$0xff]
        %v2633 = vld [vmem:[#allocation7 + $0x30] sm:$0xff]
        %v2634 = vld [vmem:[#allocation7 + $0x38] sm:$0xff]
        %v2635 = vld [vmem:[#allocation7 + $0x40] sm:$0xff]
        %v2636 = vld [vmem:[#allocation7 + $0x48] sm:$0xff]
        %v2637 = vld [vmem:[#allocation7 + $0x50] sm:$0xff]
        %v2638 = vld [vmem:[#allocation7 + $0x58] sm:$0xff]
        %v2639 = vld [vmem:[#allocation7 + $0x60] sm:$0xff]
        %v2640 = vld [vmem:[#allocation7 + $0x68] sm:$0xff]
        %v2641 = vld [vmem:[#allocation7 + $0x70] sm:$0xff]
        %v2642 = vld [vmem:[#allocation7 + $0x78] sm:$0xff]
        %v2643 = vlaneseq
        %v2644 = vshrl.u32 %v2643, 7
        %v2645 = vsub.s32 0, %v2644
        %v2646 = vrot.slane %v376, %v2645
        %2647 = vmatprep.subr.mxu0 0.0
        %2648 = vmatpush1.msra.mxu0 %v2642
        %2649 = vmatprep.subr.mxu0 0.0
        %2650 = vmatpush1.msra.mxu0 %v2641
        %2651 = vmatprep.subr.mxu0 0.0
        %2652 = vmatpush1.msra.mxu0 %v2640
        %2653 = vmatprep.subr.mxu0 0.0
        %2654 = vmatpush1.msra.mxu0 %v2639
        %2655 = vmatprep.subr.mxu0 0.0
        %2656 = vmatpush1.msra.mxu0 %v2638
        %2657 = vmatprep.subr.mxu0 0.0
        %2658 = vmatpush1.msra.mxu0 %v2637
        %2659 = vmatprep.subr.mxu0 0.0
        %2660 = vmatpush1.msra.mxu0 %v2636
        %2661 = vmatprep.subr.mxu0 0.0
        %2662 = vmatpush1.msra.mxu0 %v2635
        %2663 = vmatprep.subr.mxu0 0.0
        %2664 = vmatpush1.msra.mxu0 %v2634
        %2665 = vmatprep.subr.mxu0 0.0
        %2666 = vmatpush1.msra.mxu0 %v2633
        %2667 = vmatprep.subr.mxu0 0.0
        %2668 = vmatpush1.msra.mxu0 %v2632
        %2669 = vmatprep.subr.mxu0 0.0
        %2670 = vmatpush1.msra.mxu0 %v2631
        %2671 = vmatprep.subr.mxu0 0.0
        %2672 = vmatpush1.msra.mxu0 %v2630
        %2673 = vmatprep.subr.mxu0 0.0
        %2674 = vmatpush1.msra.mxu0 %v2629
        %2675 = vmatprep.subr.mxu0 0.0
        %2676 = vmatpush1.msra.mxu0 %v2628
        %2677 = vmatprep.subr.mxu0 0.0
        %2678 = vmatpush1.msra.mxu0 %v2627
        %2679 = vmatprep.subr.mxu0 0.0
        %2680 = vmatpush2.msra.mxu0 0.0
        %2681 = vmatprep.subr.mxu0 0.0
        %2682 = vmatpush2.msra.mxu0 0.0
        %2683 = vmatprep.subr.mxu0 0.0
        %2684 = vmatpush2.msra.mxu0 0.0
        %2685 = vmatprep.subr.mxu0 0.0
        %2686 = vmatpush2.msra.mxu0 0.0
        %2687 = vmatprep.subr.mxu0 0.0
        %2688 = vmatpush2.msra.mxu0 0.0
        %2689 = vmatprep.subr.mxu0 0.0
        %2690 = vmatpush2.msra.mxu0 0.0
        %2691 = vmatprep.subr.mxu0 0.0
        %2692 = vmatpush2.msra.mxu0 0.0
        %2693 = vmatprep.subr.mxu0 0.0
        %2694 = vmatpush2.msra.mxu0 0.0
        %2695 = vmatprep.subr.mxu0 0.0
        %2696 = vmatpush2.msra.mxu0 0.0
        %2697 = vmatprep.subr.mxu0 0.0
        %2698 = vmatpush2.msra.mxu0 0.0
        %2699 = vmatprep.subr.mxu0 0.0
        %2700 = vmatpush2.msra.mxu0 0.0
        %2701 = vmatprep.subr.mxu0 0.0
        %2702 = vmatpush2.msra.mxu0 0.0
        %2703 = vmatprep.subr.mxu0 0.0
        %2704 = vmatpush2.msra.mxu0 0.0
        %2705 = vmatprep.subr.mxu0 0.0
        %2706 = vmatpush2.msra.mxu0 0.0
        %2707 = vmatprep.subr.mxu0 0.0
        %2708 = vmatpush2.msra.mxu0 0.0
        %2709 = vmatprep.subr.mxu0 0.0
        %2710 = vmatpush2.msra.mxu0 0.0
        %2711 = vmatprep.mubr.f32.mxu0 0.0
        %2712 = vmatmul.mubr.f32.gmra.mxu0 %v2626
        %v2713 = vpop.f32.mrf.mxu0
        %v2714 = vadd.f32 %v2646, %v2713
        %v2715 = vpop.f32.mrf.mxu0
        %2716 = vdwg.mxu0
        %2717 = vst [vmem:[%s353] sm:$0xff] %v2714
        %s2718 = sand.u32 %s207, 1
        %s2719 = scalar_lea.sflag [#allocation4], %s2718
        %s2720 = sand.u32 %s207, 1
        %s2721 = smul.addr %s2720, 8
        %s2722 = scalar_lea.vmem [#allocation8], %s2721
        // Predicated region
        $region65: #{tpu_custom_call.1} parent=51 // pred_check
          %p2723 = pneg %p217
        $region66: #{tpu_custom_call.1} parent=51 // pred_check_branch
          %2725 = sbr.rel (%p2723) target = $region68
        $region67: #{tpu_custom_call.1} parent=51 // pred_region
          %s2727 = ssub.s32 128, 128
          %2728 = vsyncadd %s2719, %s2727
          %s2729 = smul.addr %s26, 128
          %s2730 = scalar_lea.hbm %s8, %s2729
          %s2732 = sshll.u32 %s2722, 4
          %s2733 = int_to_ptr.vmem [resolvable:$true] %s2732
          %2735 = dma.vmem_to_hbm [thread:$0]  %s2733, 128, %s2730, %s2719
        $region68: #{tpu_custom_call.1} parent=51 // pred_fallthru
          _
      $region52: #{tpu_custom_call.1} parent=5 // pred_fallthru
        _
      %p2736 = scmp.le.s32.totalorder 2, %s21
      // Predicated region
      $region69: #{tpu_custom_call.1} parent=5 // pred_check
        %p2737 = pneg %p2736
      $region70: #{tpu_custom_call.1} parent=5 // pred_check_branch
        %2739 = sbr.rel (%p2737) target = $region72
      $region71: #{tpu_custom_call.1} parent=5 // pred_region
        %s2740 = ssub.s32 %s21, 2
        // Predicated region
        $region73: #{tpu_custom_call.1} parent=71 // pred_check
          %p2741 = pneg %p223
        $region74: #{tpu_custom_call.1} parent=71 // pred_check_branch
          %2743 = sbr.rel (%p2741) target = $region76
        $region75: #{tpu_custom_call.1} parent=71 // pred_region
          %s2744 = sand.u32 %s208, 1
          %s2745 = scalar_lea.sflag [#allocation4], %s2744
          %s2746 = sand.u32 %s208, 1
          %s2747 = smul.addr %s2746, 8
          %s2748 = scalar_lea.vmem [#allocation8], %s2747
          %2749 = dma.done %s2745, 128
        $region76: #{tpu_custom_call.1} parent=71 // pred_fallthru
          _
      $region72: #{tpu_custom_call.1} parent=5 // pred_fallthru
        _
    $region6: #{tpu_custom_call.1} parent=1 // loop_footer
      %s25 = sadd.s32 1, %s21
    $region7: #{tpu_custom_call.1} parent=1 // loop_footer_branch
      %20 = sbr.rel target = $region3
    $region8: #{tpu_custom_call.1} parent=1 // loop_exit
      _
    %2750 = vsyncpa [#allocation3], 1
    %s2751 = scalar_lea.sflag [#allocation3], 1
    %2752 = vsyncpa %s2751, 1
    %2753 = vsyncpa [#allocation6], 1
    %2754 = vsyncpa [#allocation4], 1
    %s2755 = scalar_lea.sflag [#allocation4], 1
    %2756 = vsyncpa %s2755, 1

</llo_original>
